<compile_context>
chip_gen: v5e
topology: v5e:2x2
jax: 0.10.0
libtpu: 0.0.40
codegen_flags: <defaults>
</compile_context>

<pallas_src>
import numpy as np

import jax
import jax.numpy as jnp
from jax.experimental import pallas as pl
from jax.experimental.pallas import tpu as pltpu


def _conv_out_size(n, k, s, p):
    return (n + 2 * p - k) // s + 1


# ---------------------------------------------------------------------------
# Fused encoder kernel: one grid step == one image, everything VMEM-resident.
# ---------------------------------------------------------------------------
def _encoder_kernel(x_ref,
                    s1_ref, w1_ref, b1_ref,
                    s2_ref, w2_ref, b2_ref,
                    s3_ref, w3_ref, b3_ref,
                    wfc_ref, bfc_ref, eps_ref,
                    mean_ref, logvar_ref, z_ref):

    def conv_relu(a, s_ref, w_ref, b_ref):
        # a: (Hin, Win*Cin) bf16  ->  (Ho, Wo*Cout) bf16
        kh = s_ref.shape[0]
        acc = jnp.zeros((s_ref.shape[1], w_ref.shape[2]), jnp.float32)
        for i in range(kh):                       # static unroll over row taps
            # 0/1 row selection (stride + vertical padding baked in) — exact.
            sel = jnp.dot(s_ref[i], a, preferred_element_type=jnp.float32)
            acc += jnp.dot(sel.astype(jnp.bfloat16), w_ref[i],
                           preferred_element_type=jnp.float32)
        out = jnp.maximum(acc + b_ref[...], 0.0)  # (1, N) bias broadcasts; f32 epilogue
        return out.astype(jnp.bfloat16)

    a = x_ref[0]                                  # (H, W*3) bf16
    a = conv_relu(a, s1_ref, w1_ref, b1_ref)      # (8, 8*32)  lane-dense
    a = conv_relu(a, s2_ref, w2_ref, b2_ref)      # (2, 2*64)
    a = conv_relu(a, s3_ref, w3_ref, b3_ref)      # (Hf, Wf*128)

    # Fused fc_mean | fc_log_var: weights pre-permuted into this activation
    # layout (bakes torch's NCHW nn.Flatten) and concatenated along the out dim.
    acc = bfc_ref[...]                            # (1, 2*emb) f32
    for h in range(wfc_ref.shape[0]):             # Hf == 1 for 32x32 inputs
        acc = acc + jnp.dot(a[h:h + 1, :], wfc_ref[h],
                            preferred_element_type=jnp.float32)

    emb = mean_ref.shape[-1]
    mean = acc[:, :emb]                           # sub-vreg lane split: fine at emb=16
    log_var = acc[:, emb:]
    mean_ref[0] = mean
    logvar_ref[0] = log_var
    z_ref[0] = mean + jnp.exp(0.5 * log_var) * eps_ref[0]


# ---------------------------------------------------------------------------
# Forward wrapper
# ---------------------------------------------------------------------------
def encoder_forward(x_nchw, kp, eps):
    """Matches torch Encoder.forward: returns (z_mean, z_log_var, z)."""
    n, c, h, w = x_nchw.shape
    emb = eps.shape[-1]

    # bf16 cast BEFORE any rearrangement (halves all downstream bytes), then lay
    # each image out as a row-major (H, W*C) slab.  Pure layout glue, tiny.
    xb = jnp.transpose(x_nchw.astype(jnp.bfloat16), (0, 2, 3, 1)).reshape(n, h, w * c)
    eps3 = eps.astype(jnp.float32).reshape(n, 1, emb)

    def full(arr):   # whole-array resident block (constant index map -> DMA'd once)
        return pl.BlockSpec(arr.shape, lambda b, _nd=arr.ndim: (0,) * _nd)

    row_spec = pl.BlockSpec((1, 1, emb), lambda b: (b, 0, 0))
    out_sds = jax.ShapeDtypeStruct((n, 1, emb), jnp.float32)

    # Advisory cost estimate.
    flops = 0
    for s_m, w_m in ((kp["s1"], kp["w1"]), (kp["s2"], kp["w2"]), (kp["s3"], kp["w3"])):
        kh, ho, hin = s_m.shape
        _, kin, nout = w_m.shape
        flops += kh * (2 * ho * hin * kin + 2 * ho * kin * nout)
    hf, kfc, nfc = kp["wfc"].shape
    flops = n * (flops + hf * 2 * kfc * nfc)
    bytes_accessed = (xb.size * 2 + eps3.size * 4 + 3 * n * emb * 4
                      + sum(v.size * v.dtype.itemsize for v in kp.values()))

    z_mean, z_log_var, z = pl.pallas_call(
        _encoder_kernel,
        out_shape=(out_sds, out_sds, out_sds),
        grid_spec=pltpu.PrefetchScalarGridSpec(
            num_scalar_prefetch=0,
            grid=(n,),
            in_specs=[
                pl.BlockSpec((1, h, w * c), lambda b: (b, 0, 0)),
                full(kp["s1"]), full(kp["w1"]), full(kp["b1"]),
                full(kp["s2"]), full(kp["w2"]), full(kp["b2"]),
                full(kp["s3"]), full(kp["w3"]), full(kp["b3"]),
                full(kp["wfc"]), full(kp["bfc"]),
                pl.BlockSpec((1, 1, emb), lambda b: (b, 0, 0)),
            ],
            out_specs=(row_spec, row_spec, row_spec),
        ),
        compiler_params=pltpu.CompilerParams(
            dimension_semantics=("parallel",),        # each image can go to its own TC (v7x)
            vmem_limit_bytes=32 * 1024 * 1024,         # v7x-safe (64 MiB physical)
        ),
        cost_estimate=pl.CostEstimate(
            flops=flops, transcendentals=n * emb, bytes_accessed=bytes_accessed),
    )(xb, kp["s1"], kp["w1"], kp["b1"],
      kp["s2"], kp["w2"], kp["b2"],
      kp["s3"], kp["w3"], kp["b3"],
      kp["wfc"], kp["bfc"], eps3)

    return (z_mean.reshape(n, emb), z_log_var.reshape(n, emb), z.reshape(n, emb))


# ---------------------------------------------------------------------------
# Parameters: torch-layout init + one-time repack into kernel layouts
# ---------------------------------------------------------------------------
def init_params(key, image_size, embedding_dim):
    """Synthetic parameters in torch layouts (OIHW convs, (out,in) linears)."""
    smaller = 4 * 4 * 2
    fc_in = 128 * (image_size[1] // smaller) * (image_size[0] // smaller)
    ks = jax.random.split(key, 10)
    s = 0.05
    return {
        "conv1_w": s * jax.random.normal(ks[0], (32, 3, 3, 3), jnp.float32),
        "conv1_b": s * jax.random.normal(ks[1], (32,), jnp.float32),
        "conv2_w": s * jax.random.normal(ks[2], (64, 32, 3, 3), jnp.float32),
        "conv2_b": s * jax.random.normal(ks[3], (64,), jnp.float32),
        "conv3_w": s * jax.random.normal(ks[4], (128, 64, 3, 3), jnp.float32),
        "conv3_b": s * jax.random.normal(ks[5], (128,), jnp.float32),
        "fc_mean_w": s * jax.random.normal(ks[6], (embedding_dim, fc_in), jnp.float32),
        "fc_mean_b": s * jax.random.normal(ks[7], (embedding_dim,), jnp.float32),
        "fc_logvar_w": s * jax.random.normal(ks[8], (embedding_dim, fc_in), jnp.float32),
        "fc_logvar_b": s * jax.random.normal(ks[9], (embedding_dim,), jnp.float32),
    }


def _pack_conv(w_oihw, bias, hin, win, stride, pad):
    """OIHW conv -> (S row-tap selectors, per-tap strided Wbig, tiled bias)."""
    wnp = np.asarray(w_oihw, np.float32)
    cout, cin, kh, kw = wnp.shape
    ho = _conv_out_size(hin, kh, stride, pad)
    wo = _conv_out_size(win, kw, stride, pad)

    s_taps = np.zeros((kh, ho, hin), np.float32)
    w_taps = np.zeros((kh, win * cin, wo * cout), np.float32)
    for i in range(kh):
        for r in range(ho):
            hrow = r * stride + i - pad
            if 0 <= hrow < hin:                        # zero rows encode "same" padding
                s_taps[i, r, hrow] = 1.0
        for cpos in range(wo):
            for j in range(kw):
                wcol = cpos * stride + j - pad
                if 0 <= wcol < win:                    # zero blocks encode padding
                    w_taps[i, wcol * cin:(wcol + 1) * cin,
                           cpos * cout:(cpos + 1) * cout] = wnp[:, :, i, j].T
    bias_t = np.tile(np.asarray(bias, np.float32), wo)[None, :]     # (1, wo*cout)
    return (jnp.asarray(s_taps, jnp.bfloat16),
            jnp.asarray(w_taps, jnp.bfloat16),
            jnp.asarray(bias_t, jnp.float32), ho, wo)


def _pack_fc(w_mean, b_mean, w_logvar, b_logvar, cin, hf, wf):
    """Pre-transpose both FC heads into the (Hf, Wf*C) activation layout (bakes
    torch's NCHW nn.Flatten ordering) and concatenate them along the out dim."""
    emb = w_mean.shape[0]

    def perm(wt):
        w4 = np.asarray(wt, np.float32).reshape(emb, cin, hf, wf)
        w4 = np.transpose(w4, (2, 3, 1, 0))            # (hf, wf, cin, emb)
        return w4.reshape(hf, wf * cin, emb)

    w_cat = np.concatenate([perm(w_mean), perm(w_logvar)], axis=-1)   # (hf, wf*cin, 2emb)
    b_cat = np.concatenate([np.asarray(b_mean, np.float32),
                            np.asarray(b_logvar, np.float32)])[None, :]
    return jnp.asarray(w_cat, jnp.bfloat16), jnp.asarray(b_cat, jnp.float32)


def prepare_params(params, image_size):
    h0, w0 = image_size[0], image_size[1]
    s1, w1, b1, h1, w1o = _pack_conv(params["conv1_w"], params["conv1_b"], h0, w0, 4, 1)
    s2, w2, b2, h2, w2o = _pack_conv(params["conv2_w"], params["conv2_b"], h1, w1o, 4, 1)
    s3, w3, b3, h3, w3o = _pack_conv(params["conv3_w"], params["conv3_b"], h2, w2o, 2, 1)
    wfc, bfc = _pack_fc(params["fc_mean_w"], params["fc_mean_b"],
                        params["fc_logvar_w"], params["fc_logvar_b"],
                        128, h3, w3o)
    return {"s1": s1, "w1": w1, "b1": b1,
            "s2": s2, "w2": w2, "b2": b2,
            "s3": s3, "w3": w3, "b3": b3,
            "wfc": wfc, "bfc": bfc}


# ---------------------------------------------------------------------------
# Pure-JAX f32 reference (for a tolerance check against the bf16 kernel)
# ---------------------------------------------------------------------------
def _reference_forward(x_nchw, params, eps):
    x = x_nchw.astype(jnp.bfloat16).astype(jnp.float32)   # same input rounding as kernel

    def conv(x, w, b, stride):
        y = jax.lax.conv_general_dilated(
            x, w, window_strides=(stride, stride), padding=((1, 1), (1, 1)),
            dimension_numbers=("NCHW", "OIHW", "NCHW"))
        return jax.nn.relu(y + b[None, :, None, None])

    x = conv(x, params["conv1_w"], params["conv1_b"], 4)
    x = conv(x, params["conv2_w"], params["conv2_b"], 4)
    x = conv(x, params["conv3_w"], params["conv3_b"], 2)
    x = x.reshape(x.shape[0], -1)
    mean = x @ params["fc_mean_w"].T + params["fc_mean_b"]
    log_var = x @ params["fc_logvar_w"].T + params["fc_logvar_b"]
    z = mean + jnp.exp(0.5 * log_var) * eps
    return mean, log_var, z


if __name__ == "__main__":
    image_size = (32, 32)       # (H, W); 32 // (4*4*2) = 1  ->  fc_in = 128
    embedding_dim = 16
    batch = 2

    root = jax.random.PRNGKey(0)
    k_params, k_x, k_eps = jax.random.split(root, 3)

    params = init_params(k_params, image_size, embedding_dim)
    kparams = prepare_params(params, image_size)

    x = jax.random.normal(k_x, (batch, 3, image_size[0], image_size[1]), jnp.float32)
    # TODO(synk): torch samples epsilon via Normal(0,1).sample(); here the standard
    # normal noise is drawn deterministically with jax.random (same distribution).
    eps = jax.random.normal(k_eps, (batch, embedding_dim), jnp.float32)

    fwd = jax.jit(encoder_forward)
    z_mean, z_log_var, z = fwd(x, kparams, eps)
    jax.block_until_ready((z_mean, z_log_var, z))

    assert z_mean.shape == (batch, embedding_dim)
    assert z_log_var.shape == (batch, embedding_dim)
    assert z.shape == (batch, embedding_dim)

    # Validate against the f32 reference with a bf16-level tolerance.
    ref_mean, ref_logvar, ref_z = _reference_forward(x, params, eps)
    for got, ref in ((z_mean, ref_mean), (z_log_var, ref_logvar), (z, ref_z)):
        err = float(jnp.max(jnp.abs(got - ref)))
        assert err < 3e-2, f"max abs error too large: {err}"

    print("KERNEL_OK")
</pallas_src>

<mosaic_0001>
module attributes {stable_mosaic.version = 11 : i64} {
  func.func @_encoder_kernel(%arg0: i32, %arg1: memref<1x32x96xbf16, #tpu.memory_space<vmem>>, %arg2: memref<3x8x32xbf16, #tpu.memory_space<vmem>>, %arg3: memref<3x96x256xbf16, #tpu.memory_space<vmem>>, %arg4: memref<1x256xf32, #tpu.memory_space<vmem>>, %arg5: memref<3x2x8xbf16, #tpu.memory_space<vmem>>, %arg6: memref<3x256x128xbf16, #tpu.memory_space<vmem>>, %arg7: memref<1x128xf32, #tpu.memory_space<vmem>>, %arg8: memref<3x1x2xbf16, #tpu.memory_space<vmem>>, %arg9: memref<3x128x128xbf16, #tpu.memory_space<vmem>>, %arg10: memref<1x128xf32, #tpu.memory_space<vmem>>, %arg11: memref<1x128x32xbf16, #tpu.memory_space<vmem>>, %arg12: memref<1x32xf32, #tpu.memory_space<vmem>>, %arg13: memref<1x1x16xf32, #tpu.memory_space<vmem>>, %arg14: memref<1x1x16xf32, #tpu.memory_space<vmem>>, %arg15: memref<1x1x16xf32, #tpu.memory_space<vmem>>, %arg16: memref<1x1x16xf32, #tpu.memory_space<vmem>>) attributes {dimension_semantics = [#tpu.dimension_semantics<parallel>], iteration_bounds = array<i64: 2>, scalar_prefetch = 0 : i64, scratch_operands = 0 : i64, tpu.core_type = #tpu.core_type<tc>, window_params = [{transform_indices = @transform_0, window_bounds = array<i64: 1, 32, 96>}, {pipeline_mode = #tpu.pipeline_mode<synchronous>, transform_indices = @transform_1, window_bounds = array<i64: 3, 8, 32>}, {pipeline_mode = #tpu.pipeline_mode<synchronous>, transform_indices = @transform_2, window_bounds = array<i64: 3, 96, 256>}, {pipeline_mode = #tpu.pipeline_mode<synchronous>, transform_indices = @transform_3, window_bounds = array<i64: 1, 256>}, {pipeline_mode = #tpu.pipeline_mode<synchronous>, transform_indices = @transform_4, window_bounds = array<i64: 3, 2, 8>}, {pipeline_mode = #tpu.pipeline_mode<synchronous>, transform_indices = @transform_5, window_bounds = array<i64: 3, 256, 128>}, {pipeline_mode = #tpu.pipeline_mode<synchronous>, transform_indices = @transform_6, window_bounds = array<i64: 1, 128>}, {pipeline_mode = #tpu.pipeline_mode<synchronous>, transform_indices = @transform_7, window_bounds = array<i64: 3, 1, 2>}, {pipeline_mode = #tpu.pipeline_mode<synchronous>, transform_indices = @transform_8, window_bounds = array<i64: 3, 128, 128>}, {pipeline_mode = #tpu.pipeline_mode<synchronous>, transform_indices = @transform_9, window_bounds = array<i64: 1, 128>}, {pipeline_mode = #tpu.pipeline_mode<synchronous>, transform_indices = @transform_10, window_bounds = array<i64: 1, 128, 32>}, {pipeline_mode = #tpu.pipeline_mode<synchronous>, transform_indices = @transform_11, window_bounds = array<i64: 1, 32>}, {transform_indices = @transform_12, window_bounds = array<i64: 1, 1, 16>}, {transform_indices = @transform_13, window_bounds = array<i64: 1, 1, 16>}, {transform_indices = @transform_14, window_bounds = array<i64: 1, 1, 16>}, {transform_indices = @transform_15, window_bounds = array<i64: 1, 1, 16>}]} {
    %c0 = arith.constant 0 : index
    %c0_0 = arith.constant 0 : index
    %c0_1 = arith.constant 0 : index
    %0 = vector.load %arg1[%c0, %c0_0, %c0_1] : memref<1x32x96xbf16, #tpu.memory_space<vmem>>, vector<1x32x96xbf16>
    %1 = vector.shape_cast %0 : vector<1x32x96xbf16> to vector<32x96xbf16>
    %cst = arith.constant 0.000000e+00 : f32
    %2 = vector.broadcast %cst : f32 to vector<8x256xf32>
    %c0_2 = arith.constant 0 : index
    %c0_3 = arith.constant 0 : index
    %c0_4 = arith.constant 0 : index
    %3 = vector.load %arg2[%c0_2, %c0_3, %c0_4] : memref<3x8x32xbf16, #tpu.memory_space<vmem>>, vector<1x8x32xbf16>
    %4 = vector.shape_cast %3 : vector<1x8x32xbf16> to vector<8x32xbf16>
    %cst_5 = arith.constant dense<0.000000e+00> : vector<8x96xf32>
    %5 = tpu.matmul %4, %1, %cst_5 {dimension_numbers = #tpu.dot_dimension_numbers<[1], [0], [0], [1], [0, 0, 1, 1], [], []>} : vector<8x32xbf16>, vector<32x96xbf16>, vector<8x96xf32> -> vector<8x96xf32>
    %6 = arith.truncf %5 : vector<8x96xf32> to vector<8x96xbf16>
    %c0_6 = arith.constant 0 : index
    %c0_7 = arith.constant 0 : index
    %c0_8 = arith.constant 0 : index
    %7 = vector.load %arg3[%c0_6, %c0_7, %c0_8] : memref<3x96x256xbf16, #tpu.memory_space<vmem>>, vector<1x96x256xbf16>
    %8 = vector.shape_cast %7 : vector<1x96x256xbf16> to vector<96x256xbf16>
    %cst_9 = arith.constant dense<0.000000e+00> : vector<8x256xf32>
    %9 = tpu.matmul %6, %8, %cst_9 {dimension_numbers = #tpu.dot_dimension_numbers<[1], [0], [0], [1], [0, 0, 1, 1], [], []>} : vector<8x96xbf16>, vector<96x256xbf16>, vector<8x256xf32> -> vector<8x256xf32>
    %10 = arith.addf %2, %9 : vector<8x256xf32>
    %c1 = arith.constant 1 : index
    %c0_10 = arith.constant 0 : index
    %c0_11 = arith.constant 0 : index
    %11 = vector.load %arg2[%c1, %c0_10, %c0_11] : memref<3x8x32xbf16, #tpu.memory_space<vmem>>, vector<1x8x32xbf16>
    %12 = vector.shape_cast %11 : vector<1x8x32xbf16> to vector<8x32xbf16>
    %cst_12 = arith.constant dense<0.000000e+00> : vector<8x96xf32>
    %13 = tpu.matmul %12, %1, %cst_12 {dimension_numbers = #tpu.dot_dimension_numbers<[1], [0], [0], [1], [0, 0, 1, 1], [], []>} : vector<8x32xbf16>, vector<32x96xbf16>, vector<8x96xf32> -> vector<8x96xf32>
    %14 = arith.truncf %13 : vector<8x96xf32> to vector<8x96xbf16>
    %c1_13 = arith.constant 1 : index
    %c0_14 = arith.constant 0 : index
    %c0_15 = arith.constant 0 : index
    %15 = vector.load %arg3[%c1_13, %c0_14, %c0_15] : memref<3x96x256xbf16, #tpu.memory_space<vmem>>, vector<1x96x256xbf16>
    %16 = vector.shape_cast %15 : vector<1x96x256xbf16> to vector<96x256xbf16>
    %cst_16 = arith.constant dense<0.000000e+00> : vector<8x256xf32>
    %17 = tpu.matmul %14, %16, %cst_16 {dimension_numbers = #tpu.dot_dimension_numbers<[1], [0], [0], [1], [0, 0, 1, 1], [], []>} : vector<8x96xbf16>, vector<96x256xbf16>, vector<8x256xf32> -> vector<8x256xf32>
    %18 = arith.addf %10, %17 : vector<8x256xf32>
    %c2 = arith.constant 2 : index
    %c0_17 = arith.constant 0 : index
    %c0_18 = arith.constant 0 : index
    %19 = vector.load %arg2[%c2, %c0_17, %c0_18] : memref<3x8x32xbf16, #tpu.memory_space<vmem>>, vector<1x8x32xbf16>
    %20 = vector.shape_cast %19 : vector<1x8x32xbf16> to vector<8x32xbf16>
    %cst_19 = arith.constant dense<0.000000e+00> : vector<8x96xf32>
    %21 = tpu.matmul %20, %1, %cst_19 {dimension_numbers = #tpu.dot_dimension_numbers<[1], [0], [0], [1], [0, 0, 1, 1], [], []>} : vector<8x32xbf16>, vector<32x96xbf16>, vector<8x96xf32> -> vector<8x96xf32>
    %22 = arith.truncf %21 : vector<8x96xf32> to vector<8x96xbf16>
    %c2_20 = arith.constant 2 : index
    %c0_21 = arith.constant 0 : index
    %c0_22 = arith.constant 0 : index
    %23 = vector.load %arg3[%c2_20, %c0_21, %c0_22] : memref<3x96x256xbf16, #tpu.memory_space<vmem>>, vector<1x96x256xbf16>
    %24 = vector.shape_cast %23 : vector<1x96x256xbf16> to vector<96x256xbf16>
    %cst_23 = arith.constant dense<0.000000e+00> : vector<8x256xf32>
    %25 = tpu.matmul %22, %24, %cst_23 {dimension_numbers = #tpu.dot_dimension_numbers<[1], [0], [0], [1], [0, 0, 1, 1], [], []>} : vector<8x96xbf16>, vector<96x256xbf16>, vector<8x256xf32> -> vector<8x256xf32>
    %26 = arith.addf %18, %25 : vector<8x256xf32>
    %c0_24 = arith.constant 0 : index
    %c0_25 = arith.constant 0 : index
    %27 = vector.load %arg4[%c0_24, %c0_25] : memref<1x256xf32, #tpu.memory_space<vmem>>, vector<1x256xf32>
    %28 = vector.broadcast %27 : vector<1x256xf32> to vector<8x256xf32>
    %29 = arith.addf %26, %28 : vector<8x256xf32>
    %cst_26 = arith.constant 0.000000e+00 : f32
    %30 = vector.broadcast %cst_26 : f32 to vector<8x256xf32>
    %31 = arith.maximumf %29, %30 : vector<8x256xf32>
    %32 = arith.truncf %31 : vector<8x256xf32> to vector<8x256xbf16>
    %cst_27 = arith.constant 0.000000e+00 : f32
    %33 = vector.broadcast %cst_27 : f32 to vector<2x128xf32>
    %c0_28 = arith.constant 0 : index
    %c0_29 = arith.constant 0 : index
    %c0_30 = arith.constant 0 : index
    %34 = vector.load %arg5[%c0_28, %c0_29, %c0_30] : memref<3x2x8xbf16, #tpu.memory_space<vmem>>, vector<1x2x8xbf16>
    %35 = vector.shape_cast %34 : vector<1x2x8xbf16> to vector<2x8xbf16>
    %cst_31 = arith.constant dense<0.000000e+00> : vector<2x256xf32>
    %36 = tpu.matmul %35, %32, %cst_31 {dimension_numbers = #tpu.dot_dimension_numbers<[1], [0], [0], [1], [0, 0, 1, 1], [], []>} : vector<2x8xbf16>, vector<8x256xbf16>, vector<2x256xf32> -> vector<2x256xf32>
    %37 = arith.truncf %36 : vector<2x256xf32> to vector<2x256xbf16>
    %c0_32 = arith.constant 0 : index
    %c0_33 = arith.constant 0 : index
    %c0_34 = arith.constant 0 : index
    %38 = vector.load %arg6[%c0_32, %c0_33, %c0_34] : memref<3x256x128xbf16, #tpu.memory_space<vmem>>, vector<1x256x128xbf16>
    %39 = vector.shape_cast %38 : vector<1x256x128xbf16> to vector<256x128xbf16>
    %cst_35 = arith.constant dense<0.000000e+00> : vector<2x128xf32>
    %40 = tpu.matmul %37, %39, %cst_35 {dimension_numbers = #tpu.dot_dimension_numbers<[1], [0], [0], [1], [0, 0, 1, 1], [], []>} : vector<2x256xbf16>, vector<256x128xbf16>, vector<2x128xf32> -> vector<2x128xf32>
    %41 = arith.addf %33, %40 : vector<2x128xf32>
    %c1_36 = arith.constant 1 : index
    %c0_37 = arith.constant 0 : index
    %c0_38 = arith.constant 0 : index
    %42 = vector.load %arg5[%c1_36, %c0_37, %c0_38] : memref<3x2x8xbf16, #tpu.memory_space<vmem>>, vector<1x2x8xbf16>
    %43 = vector.shape_cast %42 : vector<1x2x8xbf16> to vector<2x8xbf16>
    %cst_39 = arith.constant dense<0.000000e+00> : vector<2x256xf32>
    %44 = tpu.matmul %43, %32, %cst_39 {dimension_numbers = #tpu.dot_dimension_numbers<[1], [0], [0], [1], [0, 0, 1, 1], [], []>} : vector<2x8xbf16>, vector<8x256xbf16>, vector<2x256xf32> -> vector<2x256xf32>
    %45 = arith.truncf %44 : vector<2x256xf32> to vector<2x256xbf16>
    %c1_40 = arith.constant 1 : index
    %c0_41 = arith.constant 0 : index
    %c0_42 = arith.constant 0 : index
    %46 = vector.load %arg6[%c1_40, %c0_41, %c0_42] : memref<3x256x128xbf16, #tpu.memory_space<vmem>>, vector<1x256x128xbf16>
    %47 = vector.shape_cast %46 : vector<1x256x128xbf16> to vector<256x128xbf16>
    %cst_43 = arith.constant dense<0.000000e+00> : vector<2x128xf32>
    %48 = tpu.matmul %45, %47, %cst_43 {dimension_numbers = #tpu.dot_dimension_numbers<[1], [0], [0], [1], [0, 0, 1, 1], [], []>} : vector<2x256xbf16>, vector<256x128xbf16>, vector<2x128xf32> -> vector<2x128xf32>
    %49 = arith.addf %41, %48 : vector<2x128xf32>
    %c2_44 = arith.constant 2 : index
    %c0_45 = arith.constant 0 : index
    %c0_46 = arith.constant 0 : index
    %50 = vector.load %arg5[%c2_44, %c0_45, %c0_46] : memref<3x2x8xbf16, #tpu.memory_space<vmem>>, vector<1x2x8xbf16>
    %51 = vector.shape_cast %50 : vector<1x2x8xbf16> to vector<2x8xbf16>
    %cst_47 = arith.constant dense<0.000000e+00> : vector<2x256xf32>
    %52 = tpu.matmul %51, %32, %cst_47 {dimension_numbers = #tpu.dot_dimension_numbers<[1], [0], [0], [1], [0, 0, 1, 1], [], []>} : vector<2x8xbf16>, vector<8x256xbf16>, vector<2x256xf32> -> vector<2x256xf32>
    %53 = arith.truncf %52 : vector<2x256xf32> to vector<2x256xbf16>
    %c2_48 = arith.constant 2 : index
    %c0_49 = arith.constant 0 : index
    %c0_50 = arith.constant 0 : index
    %54 = vector.load %arg6[%c2_48, %c0_49, %c0_50] : memref<3x256x128xbf16, #tpu.memory_space<vmem>>, vector<1x256x128xbf16>
    %55 = vector.shape_cast %54 : vector<1x256x128xbf16> to vector<256x128xbf16>
    %cst_51 = arith.constant dense<0.000000e+00> : vector<2x128xf32>
    %56 = tpu.matmul %53, %55, %cst_51 {dimension_numbers = #tpu.dot_dimension_numbers<[1], [0], [0], [1], [0, 0, 1, 1], [], []>} : vector<2x256xbf16>, vector<256x128xbf16>, vector<2x128xf32> -> vector<2x128xf32>
    %57 = arith.addf %49, %56 : vector<2x128xf32>
    %c0_52 = arith.constant 0 : index
    %c0_53 = arith.constant 0 : index
    %58 = vector.load %arg7[%c0_52, %c0_53] : memref<1x128xf32, #tpu.memory_space<vmem>>, vector<1x128xf32>
    %59 = vector.broadcast %58 : vector<1x128xf32> to vector<2x128xf32>
    %60 = arith.addf %57, %59 : vector<2x128xf32>
    %cst_54 = arith.constant 0.000000e+00 : f32
    %61 = vector.broadcast %cst_54 : f32 to vector<2x128xf32>
    %62 = arith.maximumf %60, %61 : vector<2x128xf32>
    %63 = arith.truncf %62 : vector<2x128xf32> to vector<2x128xbf16>
    %cst_55 = arith.constant 0.000000e+00 : f32
    %64 = vector.broadcast %cst_55 : f32 to vector<1x128xf32>
    %c0_56 = arith.constant 0 : index
    %c0_57 = arith.constant 0 : index
    %c0_58 = arith.constant 0 : index
    %65 = vector.load %arg8[%c0_56, %c0_57, %c0_58] : memref<3x1x2xbf16, #tpu.memory_space<vmem>>, vector<1x1x2xbf16>
    %66 = vector.shape_cast %65 : vector<1x1x2xbf16> to vector<1x2xbf16>
    %cst_59 = arith.constant dense<0.000000e+00> : vector<1x128xf32>
    %67 = tpu.matmul %66, %63, %cst_59 {dimension_numbers = #tpu.dot_dimension_numbers<[1], [0], [0], [1], [0, 0, 1, 1], [], []>} : vector<1x2xbf16>, vector<2x128xbf16>, vector<1x128xf32> -> vector<1x128xf32>
    %68 = arith.truncf %67 : vector<1x128xf32> to vector<1x128xbf16>
    %c0_60 = arith.constant 0 : index
    %c0_61 = arith.constant 0 : index
    %c0_62 = arith.constant 0 : index
    %69 = vector.load %arg9[%c0_60, %c0_61, %c0_62] : memref<3x128x128xbf16, #tpu.memory_space<vmem>>, vector<1x128x128xbf16>
    %70 = vector.shape_cast %69 : vector<1x128x128xbf16> to vector<128x128xbf16>
    %cst_63 = arith.constant dense<0.000000e+00> : vector<1x128xf32>
    %71 = tpu.matmul %68, %70, %cst_63 {dimension_numbers = #tpu.dot_dimension_numbers<[1], [0], [0], [1], [0, 0, 1, 1], [], []>} : vector<1x128xbf16>, vector<128x128xbf16>, vector<1x128xf32> -> vector<1x128xf32>
    %72 = arith.addf %64, %71 : vector<1x128xf32>
    %c1_64 = arith.constant 1 : index
    %c0_65 = arith.constant 0 : index
    %c0_66 = arith.constant 0 : index
    %73 = vector.load %arg8[%c1_64, %c0_65, %c0_66] : memref<3x1x2xbf16, #tpu.memory_space<vmem>>, vector<1x1x2xbf16>
    %74 = vector.shape_cast %73 : vector<1x1x2xbf16> to vector<1x2xbf16>
    %cst_67 = arith.constant dense<0.000000e+00> : vector<1x128xf32>
    %75 = tpu.matmul %74, %63, %cst_67 {dimension_numbers = #tpu.dot_dimension_numbers<[1], [0], [0], [1], [0, 0, 1, 1], [], []>} : vector<1x2xbf16>, vector<2x128xbf16>, vector<1x128xf32> -> vector<1x128xf32>
    %76 = arith.truncf %75 : vector<1x128xf32> to vector<1x128xbf16>
    %c1_68 = arith.constant 1 : index
    %c0_69 = arith.constant 0 : index
    %c0_70 = arith.constant 0 : index
    %77 = vector.load %arg9[%c1_68, %c0_69, %c0_70] : memref<3x128x128xbf16, #tpu.memory_space<vmem>>, vector<1x128x128xbf16>
    %78 = vector.shape_cast %77 : vector<1x128x128xbf16> to vector<128x128xbf16>
    %cst_71 = arith.constant dense<0.000000e+00> : vector<1x128xf32>
    %79 = tpu.matmul %76, %78, %cst_71 {dimension_numbers = #tpu.dot_dimension_numbers<[1], [0], [0], [1], [0, 0, 1, 1], [], []>} : vector<1x128xbf16>, vector<128x128xbf16>, vector<1x128xf32> -> vector<1x128xf32>
    %80 = arith.addf %72, %79 : vector<1x128xf32>
    %c2_72 = arith.constant 2 : index
    %c0_73 = arith.constant 0 : index
    %c0_74 = arith.constant 0 : index
    %81 = vector.load %arg8[%c2_72, %c0_73, %c0_74] : memref<3x1x2xbf16, #tpu.memory_space<vmem>>, vector<1x1x2xbf16>
    %82 = vector.shape_cast %81 : vector<1x1x2xbf16> to vector<1x2xbf16>
    %cst_75 = arith.constant dense<0.000000e+00> : vector<1x128xf32>
    %83 = tpu.matmul %82, %63, %cst_75 {dimension_numbers = #tpu.dot_dimension_numbers<[1], [0], [0], [1], [0, 0, 1, 1], [], []>} : vector<1x2xbf16>, vector<2x128xbf16>, vector<1x128xf32> -> vector<1x128xf32>
    %84 = arith.truncf %83 : vector<1x128xf32> to vector<1x128xbf16>
    %c2_76 = arith.constant 2 : index
    %c0_77 = arith.constant 0 : index
    %c0_78 = arith.constant 0 : index
    %85 = vector.load %arg9[%c2_76, %c0_77, %c0_78] : memref<3x128x128xbf16, #tpu.memory_space<vmem>>, vector<1x128x128xbf16>
    %86 = vector.shape_cast %85 : vector<1x128x128xbf16> to vector<128x128xbf16>
    %cst_79 = arith.constant dense<0.000000e+00> : vector<1x128xf32>
    %87 = tpu.matmul %84, %86, %cst_79 {dimension_numbers = #tpu.dot_dimension_numbers<[1], [0], [0], [1], [0, 0, 1, 1], [], []>} : vector<1x128xbf16>, vector<128x128xbf16>, vector<1x128xf32> -> vector<1x128xf32>
    %88 = arith.addf %80, %87 : vector<1x128xf32>
    %c0_80 = arith.constant 0 : index
    %c0_81 = arith.constant 0 : index
    %89 = vector.load %arg10[%c0_80, %c0_81] : memref<1x128xf32, #tpu.memory_space<vmem>>, vector<1x128xf32>
    %90 = arith.addf %88, %89 : vector<1x128xf32>
    %cst_82 = arith.constant 0.000000e+00 : f32
    %91 = vector.broadcast %cst_82 : f32 to vector<1x128xf32>
    %92 = arith.maximumf %90, %91 : vector<1x128xf32>
    %93 = arith.truncf %92 : vector<1x128xf32> to vector<1x128xbf16>
    %c0_83 = arith.constant 0 : index
    %c0_84 = arith.constant 0 : index
    %94 = vector.load %arg12[%c0_83, %c0_84] : memref<1x32xf32, #tpu.memory_space<vmem>>, vector<1x32xf32>
    %c0_85 = arith.constant 0 : index
    %c0_86 = arith.constant 0 : index
    %c0_87 = arith.constant 0 : index
    %95 = vector.load %arg11[%c0_85, %c0_86, %c0_87] : memref<1x128x32xbf16, #tpu.memory_space<vmem>>, vector<1x128x32xbf16>
    %96 = vector.shape_cast %95 : vector<1x128x32xbf16> to vector<128x32xbf16>
    %cst_88 = arith.constant dense<0.000000e+00> : vector<1x32xf32>
    %97 = tpu.matmul %93, %96, %cst_88 {dimension_numbers = #tpu.dot_dimension_numbers<[1], [0], [0], [1], [0, 0, 1, 1], [], []>} : vector<1x128xbf16>, vector<128x32xbf16>, vector<1x32xf32> -> vector<1x32xf32>
    %98 = arith.addf %94, %97 : vector<1x32xf32>
    %99 = vector.extract_strided_slice %98 {offsets = [0, 0], sizes = [1, 16], strides = [1, 1]} : vector<1x32xf32> to vector<1x16xf32>
    %100 = vector.extract_strided_slice %98 {offsets = [0, 16], sizes = [1, 16], strides = [1, 1]} : vector<1x32xf32> to vector<1x16xf32>
    %c0_89 = arith.constant 0 : index
    %c0_90 = arith.constant 0 : index
    %c0_91 = arith.constant 0 : index
    %101 = vector.load %arg14[%c0_89, %c0_90, %c0_91] : memref<1x1x16xf32, #tpu.memory_space<vmem>>, vector<1x1x16xf32>
    %102 = vector.shape_cast %101 : vector<1x1x16xf32> to vector<1x16xf32>
    %103 = vector.shape_cast %99 : vector<1x16xf32> to vector<1x1x16xf32>
    tpu.vector_store %arg14[%c0_89, %c0_90, %c0_91], %103 {strides = array<i32>} : memref<1x1x16xf32, #tpu.memory_space<vmem>>, vector<1x1x16xf32>,
    %c0_92 = arith.constant 0 : index
    %c0_93 = arith.constant 0 : index
    %c0_94 = arith.constant 0 : index
    %104 = vector.load %arg15[%c0_92, %c0_93, %c0_94] : memref<1x1x16xf32, #tpu.memory_space<vmem>>, vector<1x1x16xf32>
    %105 = vector.shape_cast %104 : vector<1x1x16xf32> to vector<1x16xf32>
    %106 = vector.shape_cast %100 : vector<1x16xf32> to vector<1x1x16xf32>
    tpu.vector_store %arg15[%c0_92, %c0_93, %c0_94], %106 {strides = array<i32>} : memref<1x1x16xf32, #tpu.memory_space<vmem>>, vector<1x1x16xf32>,
    %cst_95 = arith.constant 5.000000e-01 : f32
    %107 = vector.broadcast %cst_95 : f32 to vector<1x16xf32>
    %108 = arith.mulf %107, %100 : vector<1x16xf32>
    %109 = math.exp %108 : vector<1x16xf32>
    %c0_96 = arith.constant 0 : index
    %c0_97 = arith.constant 0 : index
    %c0_98 = arith.constant 0 : index
    %110 = vector.load %arg13[%c0_96, %c0_97, %c0_98] : memref<1x1x16xf32, #tpu.memory_space<vmem>>, vector<1x1x16xf32>
    %111 = vector.shape_cast %110 : vector<1x1x16xf32> to vector<1x16xf32>
    %112 = arith.mulf %109, %111 : vector<1x16xf32>
    %113 = arith.addf %99, %112 : vector<1x16xf32>
    %c0_99 = arith.constant 0 : index
    %c0_100 = arith.constant 0 : index
    %c0_101 = arith.constant 0 : index
    %114 = vector.load %arg16[%c0_99, %c0_100, %c0_101] : memref<1x1x16xf32, #tpu.memory_space<vmem>>, vector<1x1x16xf32>
    %115 = vector.shape_cast %114 : vector<1x1x16xf32> to vector<1x16xf32>
    %116 = vector.shape_cast %113 : vector<1x16xf32> to vector<1x1x16xf32>
    tpu.vector_store %arg16[%c0_99, %c0_100, %c0_101], %116 {strides = array<i32>} : memref<1x1x16xf32, #tpu.memory_space<vmem>>, vector<1x1x16xf32>,
    return
  }
  func.func @transform_0(%arg0: i32) -> (i32, i32, i32) {
    %c0_i32 = arith.constant 0 : i32
    %c0_i32_0 = arith.constant 0 : i32
    %c0_i32_1 = arith.constant 0 : i32
    return %arg0, %c0_i32, %c0_i32_0 : i32, i32, i32
  }
  func.func @transform_1(%arg0: i32) -> (i32, i32, i32) {
    %c0_i32 = arith.constant 0 : i32
    %c0_i32_0 = arith.constant 0 : i32
    %c0_i32_1 = arith.constant 0 : i32
    %c0_i32_2 = arith.constant 0 : i32
    return %c0_i32, %c0_i32_0, %c0_i32_1 : i32, i32, i32
  }
  func.func @transform_2(%arg0: i32) -> (i32, i32, i32) {
    %c0_i32 = arith.constant 0 : i32
    %c0_i32_0 = arith.constant 0 : i32
    %c0_i32_1 = arith.constant 0 : i32
    %c0_i32_2 = arith.constant 0 : i32
    return %c0_i32, %c0_i32_0, %c0_i32_1 : i32, i32, i32
  }
  func.func @transform_3(%arg0: i32) -> (i32, i32) {
    %c0_i32 = arith.constant 0 : i32
    %c0_i32_0 = arith.constant 0 : i32
    %c0_i32_1 = arith.constant 0 : i32
    return %c0_i32, %c0_i32_0 : i32, i32
  }
  func.func @transform_4(%arg0: i32) -> (i32, i32, i32) {
    %c0_i32 = arith.constant 0 : i32
    %c0_i32_0 = arith.constant 0 : i32
    %c0_i32_1 = arith.constant 0 : i32
    %c0_i32_2 = arith.constant 0 : i32
    return %c0_i32, %c0_i32_0, %c0_i32_1 : i32, i32, i32
  }
  func.func @transform_5(%arg0: i32) -> (i32, i32, i32) {
    %c0_i32 = arith.constant 0 : i32
    %c0_i32_0 = arith.constant 0 : i32
    %c0_i32_1 = arith.constant 0 : i32
    %c0_i32_2 = arith.constant 0 : i32
    return %c0_i32, %c0_i32_0, %c0_i32_1 : i32, i32, i32
  }
  func.func @transform_6(%arg0: i32) -> (i32, i32) {
    %c0_i32 = arith.constant 0 : i32
    %c0_i32_0 = arith.constant 0 : i32
    %c0_i32_1 = arith.constant 0 : i32
    return %c0_i32, %c0_i32_0 : i32, i32
  }
  func.func @transform_7(%arg0: i32) -> (i32, i32, i32) {
    %c0_i32 = arith.constant 0 : i32
    %c0_i32_0 = arith.constant 0 : i32
    %c0_i32_1 = arith.constant 0 : i32
    %c0_i32_2 = arith.constant 0 : i32
    return %c0_i32, %c0_i32_0, %c0_i32_1 : i32, i32, i32
  }
  func.func @transform_8(%arg0: i32) -> (i32, i32, i32) {
    %c0_i32 = arith.constant 0 : i32
    %c0_i32_0 = arith.constant 0 : i32
    %c0_i32_1 = arith.constant 0 : i32
    %c0_i32_2 = arith.constant 0 : i32
    return %c0_i32, %c0_i32_0, %c0_i32_1 : i32, i32, i32
  }
  func.func @transform_9(%arg0: i32) -> (i32, i32) {
    %c0_i32 = arith.constant 0 : i32
    %c0_i32_0 = arith.constant 0 : i32
    %c0_i32_1 = arith.constant 0 : i32
    return %c0_i32, %c0_i32_0 : i32, i32
  }
  func.func @transform_10(%arg0: i32) -> (i32, i32, i32) {
    %c0_i32 = arith.constant 0 : i32
    %c0_i32_0 = arith.constant 0 : i32
    %c0_i32_1 = arith.constant 0 : i32
    %c0_i32_2 = arith.constant 0 : i32
    return %c0_i32, %c0_i32_0, %c0_i32_1 : i32, i32, i32
  }
  func.func @transform_11(%arg0: i32) -> (i32, i32) {
    %c0_i32 = arith.constant 0 : i32
    %c0_i32_0 = arith.constant 0 : i32
    %c0_i32_1 = arith.constant 0 : i32
    return %c0_i32, %c0_i32_0 : i32, i32
  }
  func.func @transform_12(%arg0: i32) -> (i32, i32, i32) {
    %c0_i32 = arith.constant 0 : i32
    %c0_i32_0 = arith.constant 0 : i32
    %c0_i32_1 = arith.constant 0 : i32
    return %arg0, %c0_i32, %c0_i32_0 : i32, i32, i32
  }
  func.func @transform_13(%arg0: i32) -> (i32, i32, i32) {
    %c0_i32 = arith.constant 0 : i32
    %c0_i32_0 = arith.constant 0 : i32
    %c0_i32_1 = arith.constant 0 : i32
    return %arg0, %c0_i32, %c0_i32_0 : i32, i32, i32
  }
  func.func @transform_14(%arg0: i32) -> (i32, i32, i32) {
    %c0_i32 = arith.constant 0 : i32
    %c0_i32_0 = arith.constant 0 : i32
    %c0_i32_1 = arith.constant 0 : i32
    return %arg0, %c0_i32, %c0_i32_0 : i32, i32, i32
  }
  func.func @transform_15(%arg0: i32) -> (i32, i32, i32) {
    %c0_i32 = arith.constant 0 : i32
    %c0_i32_0 = arith.constant 0 : i32
    %c0_i32_1 = arith.constant 0 : i32
    return %arg0, %c0_i32, %c0_i32_0 : i32, i32, i32
  }
}

</mosaic_0001>

<llo_original>
// kernel: encoder_forward.1
$region0: #{encoder_forward.1}
  #allocation0 [shape = 'u32[]', space=smem, size = 0x4, offset = 0x4, fixed_abs, tag = 'smem constant byte address 0x4 - core index']
  #allocation1 [shape = 'u32[72,128]{1,0:T(1,128)}', space=vmem, size = 0x9000, scoped, tag = 'internal scratch']
  %s0 = inlined_call_operand.vmem [shape: bf16[2,32,96], index: 0, kind: input, shape index: {}]
  %s1 = inlined_call_operand.vmem [shape: bf16[3,8,32], index: 1, kind: input, shape index: {}]
  %s2 = inlined_call_operand.vmem [shape: bf16[3,96,256], index: 2, kind: input, shape index: {}]
  %s3 = inlined_call_operand.hbm [shape: f32[1,256], index: 3, kind: input, shape index: {}]
  %s4 = inlined_call_operand.hbm [shape: bf16[3,2,8], index: 4, kind: input, shape index: {}]
  %s5 = inlined_call_operand.vmem [shape: bf16[3,256,128], index: 5, kind: input, shape index: {}]
  %s6 = inlined_call_operand.hbm [shape: f32[1,128], index: 6, kind: input, shape index: {}]
  %s7 = inlined_call_operand.vmem [shape: bf16[3,1,2], index: 7, kind: input, shape index: {}]
  %s8 = inlined_call_operand.hbm [shape: bf16[3,128,128], index: 8, kind: input, shape index: {}]
  %s9 = inlined_call_operand.hbm [shape: f32[1,128], index: 9, kind: input, shape index: {}]
  %s10 = inlined_call_operand.vmem [shape: bf16[1,128,32], index: 10, kind: input, shape index: {}]
  %s11 = inlined_call_operand.hbm [shape: f32[1,32], index: 11, kind: input, shape index: {}]
  %s12 = inlined_call_operand.hbm [shape: f32[2,1,16], index: 12, kind: input, shape index: {}]
  %s13 = inlined_call_operand.hbm [shape: f32[2,1,16], index: 13, kind: output, shape index: {0}]
  %s14 = inlined_call_operand.hbm [shape: f32[2,1,16], index: 14, kind: output, shape index: {1}]
  %s15 = inlined_call_operand.hbm [shape: f32[2,1,16], index: 15, kind: output, shape index: {2}]
  %16 = xla_tuple %s13, %s14, %s15
  %s17 = sld [smem:[#allocation0]]
  $region129: #{encoder_forward.1} parent=0
    _
  %s19 = ssub.s32 1, %s17
  %s20 = scalar_select 0, %s19, %s17
  $region1: #{encoder_forward.1} parent=0
    #allocation2 [shape = 'u8[1024]{0}', space=vmem, size = 0x400, scoped, tag = 'input window, operand 3, single buffered']
    #allocation3 [shape = 's32[2]{0}', space=sflag, size = 0x8, scoped, tag = 'scoped memory for encoder_forward.1']
    #allocation4 [shape = 's32[2]{0}', space=sflag, size = 0x8, scoped, tag = 'scoped memory for encoder_forward.1']
    #allocation5 [shape = 'u8[1536]{0}', space=vmem, size = 0x800, scoped, tag = 'input window, operand 4, single buffered']
    #allocation6 [shape = 's32[1]{0}', space=sflag, size = 0x4, scoped, tag = 'scoped memory for encoder_forward.1']
    #allocation7 [shape = 'u8[512]{0}', space=vmem, size = 0x400, scoped, tag = 'input window, operand 6, single buffered']
    #allocation8 [shape = 'u8[98304]{0}', space=vmem, size = 0x18000, scoped, tag = 'input window, operand 8, single buffered']
    #allocation9 [shape = 's32[1]{0}', space=sflag, size = 0x4, scoped, tag = 'scoped memory for encoder_forward.1']
    #allocation10 [shape = 'u8[512]{0}', space=vmem, size = 0x400, scoped, tag = 'input window, operand 9, single buffered']
    #allocation11 [shape = 'u8[512]{0}', space=vmem, size = 0x400, scoped, tag = 'input window, operand 11, single buffered']
    #allocation12 [shape = 's32[1]{0}', space=sflag, size = 0x4, scoped, tag = 'scoped memory for encoder_forward.1']
    #allocation13 [shape = 'u8[1024]{0}', space=vmem, size = 0x400, scoped, tag = 'input window, operand 12']
    #allocation14 [shape = 'u8[1024]{0}', space=vmem, size = 0x400, scoped, tag = 'output window, operand 0']
    #allocation15 [shape = 'u8[1024]{0}', space=vmem, size = 0x400, scoped, tag = 'output window, operand 1']
    #allocation16 [shape = 's32[2]{0}', space=sflag, size = 0x8, scoped, tag = 'scoped memory for encoder_forward.1']
    #allocation17 [shape = 'u8[1024]{0}', space=vmem, size = 0x400, scoped, tag = 'output window, operand 2']
    %21 = vsyncpa [#allocation3], 0
    %22 = vsyncpa [#allocation6], 0
    %23 = vsyncpa [#allocation9], 0
    %24 = vsyncpa [#allocation12], 0
    %25 = vsyncpa [#allocation4], 0
    %s26 = scalar_lea.sflag [#allocation4], 1
    %27 = vsyncpa %s26, 0
    %28 = vsyncpa [#allocation16], 0
    %s29 = scalar_lea.sflag [#allocation16], 1
    %30 = vsyncpa %s29, 0
    loop: start=0, step=1, limit=4
    $region2: #{encoder_forward.1} parent=1 // loop_pre_header
      _
    $region3: #{encoder_forward.1} parent=1 // loop_header
      %s32 = sphi 0, %s36
      %p33 = scmp.ge.s32.totalorder %s32, 4
      %s42 = sphi 0, %s44
      %s45 = sphi 0, %s42
      %s46 = sphi 0, %s45
      %s62 = sphi 0, %s46
      %s66 = sphi 0, %s66
      %s68 = sphi 0, %s66
      %s69 = sphi 0, %s68
      %s83 = sphi 0, %s69
      %s87 = sphi 0, %s87
      %s89 = sphi 0, %s87
      %s90 = sphi 0, %s89
      %s104 = sphi 0, %s90
      %s108 = sphi 0, %s108
      %s110 = sphi 0, %s108
      %s111 = sphi 0, %s110
      %s125 = sphi 0, %s111
      %s129 = sphi 0, %s129
      %s131 = sphi 0, %s129
      %s132 = sphi 0, %s131
      %s146 = sphi 0, %s132
      %s150 = sphi 0, %s150
      %s152 = sphi 0, %s150
      %s153 = sphi 0, %s152
      %s167 = sphi 0, %s153
      %s171 = sphi 0, %s171
      %s173 = sphi 0, %s171
      %s174 = sphi 0, %s173
      %s188 = sphi 0, %s174
      %s192 = sphi 0, %s192
      %s194 = sphi 0, %s192
      %s195 = sphi 0, %s194
      %s209 = sphi 0, %s195
      %s213 = sphi 0, %s213
      %s215 = sphi 0, %s213
      %s216 = sphi 0, %s215
      %s230 = sphi 0, %s216
      %s234 = sphi 0, %s234
      %s236 = sphi 0, %s234
      %s237 = sphi 0, %s236
      %s251 = sphi 0, %s237
      %s255 = sphi 0, %s255
      %s257 = sphi 0, %s255
      %s258 = sphi 0, %s257
      %s272 = sphi 0, %s258
      %s276 = sphi 0, %s276
      %s278 = sphi 0, %s276
      %s279 = sphi 0, %s278
      %s293 = sphi 0, %s279
      %s299 = sphi 0, %s301
      %s302 = sphi 0, %s299
      %s303 = sphi 0, %s302
      %s319 = sphi 0, %s303
      %s325 = sphi 0, %s327
      %s328 = sphi 0, %s325
      %s329 = sphi 0, %s328
      %s345 = sphi 0, %s329
      %s351 = sphi 0, %s353
      %s354 = sphi 0, %s351
      %s355 = sphi 0, %s354
      %s371 = sphi 0, %s355
      %s377 = sphi 0, %s379
      %s380 = sphi 0, %s377
      %s381 = sphi 0, %s380
      %s397 = sphi 0, %s381
    $region4: #{encoder_forward.1} parent=1 // loop_header_branch
      %35 = sbr.rel (%p33) target = $region8
    $region5: #{encoder_forward.1} parent=1 // loop_body
      %s37 = ssub.s32 %s32, 1
      %s38 = ssub.s32 %s32, 2
      %s39 = sadd.s32 %s32, 1
      %s40 = ssub.s32 %s32, %s39
      %p41 = scmp.eq.s32.totalorder %s40, 0
      %s43 = sadd.s32 %s42, 1
      %s44 = scalar_select %p41, %s42, %s43
      %p47 = pneg %p41
      %p48 = scmp.eq.s32.totalorder %s32, 1
      %p49 = por %p47, %p48
      %p50 = scmp.ne.s32.totalorder %s42, %s45
      %p51 = scmp.eq.s32.totalorder %s32, 0
      %p52 = por %p50, %p51
      %p53 = scmp.ne.s32.totalorder %s42, %s45
      %p54 = scmp.eq.s32.totalorder %s37, 1
      %p55 = por %p53, %p54
      %p56 = scmp.ne.s32.totalorder %s45, %s46
      %p57 = scmp.eq.s32.totalorder %s37, 0
      %p58 = por %p56, %p57
      %p59 = scmp.ne.s32.totalorder %s45, %s46
      %p60 = scmp.eq.s32.totalorder %s38, 1
      %p61 = por %p59, %p60
      %p63 = scmp.ne.s32.totalorder %s46, %s62
      %p64 = scmp.eq.s32.totalorder %s38, 0
      %p65 = por %p63, %p64
      %s67 = sadd.s32 %s66, 1
      %p70 = scmp.eq.s32.totalorder %s32, 1
      %p71 = scmp.ne.s32.totalorder %s66, %s68
      %p72 = scmp.eq.s32.totalorder %s32, 0
      %p73 = por %p71, %p72
      %p74 = scmp.ne.s32.totalorder %s66, %s68
      %p75 = scmp.eq.s32.totalorder %s37, 1
      %p76 = por %p74, %p75
      %p77 = scmp.ne.s32.totalorder %s68, %s69
      %p78 = scmp.eq.s32.totalorder %s37, 0
      %p79 = por %p77, %p78
      %p80 = scmp.ne.s32.totalorder %s68, %s69
      %p81 = scmp.eq.s32.totalorder %s38, 1
      %p82 = por %p80, %p81
      %p84 = scmp.ne.s32.totalorder %s69, %s83
      %p85 = scmp.eq.s32.totalorder %s38, 0
      %p86 = por %p84, %p85
      %s88 = sadd.s32 %s87, 1
      %p91 = scmp.eq.s32.totalorder %s32, 1
      %p92 = scmp.ne.s32.totalorder %s87, %s89
      %p93 = scmp.eq.s32.totalorder %s32, 0
      %p94 = por %p92, %p93
      %p95 = scmp.ne.s32.totalorder %s87, %s89
      %p96 = scmp.eq.s32.totalorder %s37, 1
      %p97 = por %p95, %p96
      %p98 = scmp.ne.s32.totalorder %s89, %s90
      %p99 = scmp.eq.s32.totalorder %s37, 0
      %p100 = por %p98, %p99
      %p101 = scmp.ne.s32.totalorder %s89, %s90
      %p102 = scmp.eq.s32.totalorder %s38, 1
      %p103 = por %p101, %p102
      %p105 = scmp.ne.s32.totalorder %s90, %s104
      %p106 = scmp.eq.s32.totalorder %s38, 0
      %p107 = por %p105, %p106
      %s109 = sadd.s32 %s108, 1
      %p112 = scmp.eq.s32.totalorder %s32, 1
      %p113 = scmp.ne.s32.totalorder %s108, %s110
      %p114 = scmp.eq.s32.totalorder %s32, 0
      %p115 = por %p113, %p114
      %p116 = scmp.ne.s32.totalorder %s108, %s110
      %p117 = scmp.eq.s32.totalorder %s37, 1
      %p118 = por %p116, %p117
      %p119 = scmp.ne.s32.totalorder %s110, %s111
      %p120 = scmp.eq.s32.totalorder %s37, 0
      %p121 = por %p119, %p120
      %p122 = scmp.ne.s32.totalorder %s110, %s111
      %p123 = scmp.eq.s32.totalorder %s38, 1
      %p124 = por %p122, %p123
      %p126 = scmp.ne.s32.totalorder %s111, %s125
      %p127 = scmp.eq.s32.totalorder %s38, 0
      %p128 = por %p126, %p127
      %s130 = sadd.s32 %s129, 1
      %p133 = scmp.eq.s32.totalorder %s32, 1
      %p134 = scmp.ne.s32.totalorder %s129, %s131
      %p135 = scmp.eq.s32.totalorder %s32, 0
      %p136 = por %p134, %p135
      %p137 = scmp.ne.s32.totalorder %s129, %s131
      %p138 = scmp.eq.s32.totalorder %s37, 1
      %p139 = por %p137, %p138
      %p140 = scmp.ne.s32.totalorder %s131, %s132
      %p141 = scmp.eq.s32.totalorder %s37, 0
      %p142 = por %p140, %p141
      %p143 = scmp.ne.s32.totalorder %s131, %s132
      %p144 = scmp.eq.s32.totalorder %s38, 1
      %p145 = por %p143, %p144
      %p147 = scmp.ne.s32.totalorder %s132, %s146
      %p148 = scmp.eq.s32.totalorder %s38, 0
      %p149 = por %p147, %p148
      %s151 = sadd.s32 %s150, 1
      %p154 = scmp.eq.s32.totalorder %s32, 1
      %p155 = scmp.ne.s32.totalorder %s150, %s152
      %p156 = scmp.eq.s32.totalorder %s32, 0
      %p157 = por %p155, %p156
      %p158 = scmp.ne.s32.totalorder %s150, %s152
      %p159 = scmp.eq.s32.totalorder %s37, 1
      %p160 = por %p158, %p159
      %p161 = scmp.ne.s32.totalorder %s152, %s153
      %p162 = scmp.eq.s32.totalorder %s37, 0
      %p163 = por %p161, %p162
      %p164 = scmp.ne.s32.totalorder %s152, %s153
      %p165 = scmp.eq.s32.totalorder %s38, 1
      %p166 = por %p164, %p165
      %p168 = scmp.ne.s32.totalorder %s153, %s167
      %p169 = scmp.eq.s32.totalorder %s38, 0
      %p170 = por %p168, %p169
      %s172 = sadd.s32 %s171, 1
      %p175 = scmp.eq.s32.totalorder %s32, 1
      %p176 = scmp.ne.s32.totalorder %s171, %s173
      %p177 = scmp.eq.s32.totalorder %s32, 0
      %p178 = por %p176, %p177
      %p179 = scmp.ne.s32.totalorder %s171, %s173
      %p180 = scmp.eq.s32.totalorder %s37, 1
      %p181 = por %p179, %p180
      %p182 = scmp.ne.s32.totalorder %s173, %s174
      %p183 = scmp.eq.s32.totalorder %s37, 0
      %p184 = por %p182, %p183
      %p185 = scmp.ne.s32.totalorder %s173, %s174
      %p186 = scmp.eq.s32.totalorder %s38, 1
      %p187 = por %p185, %p186
      %p189 = scmp.ne.s32.totalorder %s174, %s188
      %p190 = scmp.eq.s32.totalorder %s38, 0
      %p191 = por %p189, %p190
      %s193 = sadd.s32 %s192, 1
      %p196 = scmp.eq.s32.totalorder %s32, 1
      %p197 = scmp.ne.s32.totalorder %s192, %s194
      %p198 = scmp.eq.s32.totalorder %s32, 0
      %p199 = por %p197, %p198
      %p200 = scmp.ne.s32.totalorder %s192, %s194
      %p201 = scmp.eq.s32.totalorder %s37, 1
      %p202 = por %p200, %p201
      %p203 = scmp.ne.s32.totalorder %s194, %s195
      %p204 = scmp.eq.s32.totalorder %s37, 0
      %p205 = por %p203, %p204
      %p206 = scmp.ne.s32.totalorder %s194, %s195
      %p207 = scmp.eq.s32.totalorder %s38, 1
      %p208 = por %p206, %p207
      %p210 = scmp.ne.s32.totalorder %s195, %s209
      %p211 = scmp.eq.s32.totalorder %s38, 0
      %p212 = por %p210, %p211
      %s214 = sadd.s32 %s213, 1
      %p217 = scmp.eq.s32.totalorder %s32, 1
      %p218 = scmp.ne.s32.totalorder %s213, %s215
      %p219 = scmp.eq.s32.totalorder %s32, 0
      %p220 = por %p218, %p219
      %p221 = scmp.ne.s32.totalorder %s213, %s215
      %p222 = scmp.eq.s32.totalorder %s37, 1
      %p223 = por %p221, %p222
      %p224 = scmp.ne.s32.totalorder %s215, %s216
      %p225 = scmp.eq.s32.totalorder %s37, 0
      %p226 = por %p224, %p225
      %p227 = scmp.ne.s32.totalorder %s215, %s216
      %p228 = scmp.eq.s32.totalorder %s38, 1
      %p229 = por %p227, %p228
      %p231 = scmp.ne.s32.totalorder %s216, %s230
      %p232 = scmp.eq.s32.totalorder %s38, 0
      %p233 = por %p231, %p232
      %s235 = sadd.s32 %s234, 1
      %p238 = scmp.eq.s32.totalorder %s32, 1
      %p239 = scmp.ne.s32.totalorder %s234, %s236
      %p240 = scmp.eq.s32.totalorder %s32, 0
      %p241 = por %p239, %p240
      %p242 = scmp.ne.s32.totalorder %s234, %s236
      %p243 = scmp.eq.s32.totalorder %s37, 1
      %p244 = por %p242, %p243
      %p245 = scmp.ne.s32.totalorder %s236, %s237
      %p246 = scmp.eq.s32.totalorder %s37, 0
      %p247 = por %p245, %p246
      %p248 = scmp.ne.s32.totalorder %s236, %s237
      %p249 = scmp.eq.s32.totalorder %s38, 1
      %p250 = por %p248, %p249
      %p252 = scmp.ne.s32.totalorder %s237, %s251
      %p253 = scmp.eq.s32.totalorder %s38, 0
      %p254 = por %p252, %p253
      %s256 = sadd.s32 %s255, 1
      %p259 = scmp.eq.s32.totalorder %s32, 1
      %p260 = scmp.ne.s32.totalorder %s255, %s257
      %p261 = scmp.eq.s32.totalorder %s32, 0
      %p262 = por %p260, %p261
      %p263 = scmp.ne.s32.totalorder %s255, %s257
      %p264 = scmp.eq.s32.totalorder %s37, 1
      %p265 = por %p263, %p264
      %p266 = scmp.ne.s32.totalorder %s257, %s258
      %p267 = scmp.eq.s32.totalorder %s37, 0
      %p268 = por %p266, %p267
      %p269 = scmp.ne.s32.totalorder %s257, %s258
      %p270 = scmp.eq.s32.totalorder %s38, 1
      %p271 = por %p269, %p270
      %p273 = scmp.ne.s32.totalorder %s258, %s272
      %p274 = scmp.eq.s32.totalorder %s38, 0
      %p275 = por %p273, %p274
      %s277 = sadd.s32 %s276, 1
      %p280 = scmp.eq.s32.totalorder %s32, 1
      %p281 = scmp.ne.s32.totalorder %s276, %s278
      %p282 = scmp.eq.s32.totalorder %s32, 0
      %p283 = por %p281, %p282
      %p284 = scmp.ne.s32.totalorder %s276, %s278
      %p285 = scmp.eq.s32.totalorder %s37, 1
      %p286 = por %p284, %p285
      %p287 = scmp.ne.s32.totalorder %s278, %s279
      %p288 = scmp.eq.s32.totalorder %s37, 0
      %p289 = por %p287, %p288
      %p290 = scmp.ne.s32.totalorder %s278, %s279
      %p291 = scmp.eq.s32.totalorder %s38, 1
      %p292 = por %p290, %p291
      %p294 = scmp.ne.s32.totalorder %s279, %s293
      %p295 = scmp.eq.s32.totalorder %s38, 0
      %p296 = por %p294, %p295
      %s297 = ssub.s32 %s32, %s39
      %p298 = scmp.eq.s32.totalorder %s297, 0
      %s300 = sadd.s32 %s299, 1
      %s301 = scalar_select %p298, %s299, %s300
      %p304 = pneg %p298
      %p305 = scmp.eq.s32.totalorder %s32, 1
      %p306 = por %p304, %p305
      %p307 = scmp.ne.s32.totalorder %s299, %s302
      %p308 = scmp.eq.s32.totalorder %s32, 0
      %p309 = por %p307, %p308
      %p310 = scmp.ne.s32.totalorder %s299, %s302
      %p311 = scmp.eq.s32.totalorder %s37, 1
      %p312 = por %p310, %p311
      %p313 = scmp.ne.s32.totalorder %s302, %s303
      %p314 = scmp.eq.s32.totalorder %s37, 0
      %p315 = por %p313, %p314
      %p316 = scmp.ne.s32.totalorder %s302, %s303
      %p317 = scmp.eq.s32.totalorder %s38, 1
      %p318 = por %p316, %p317
      %p320 = scmp.ne.s32.totalorder %s303, %s319
      %p321 = scmp.eq.s32.totalorder %s38, 0
      %p322 = por %p320, %p321
      %s323 = ssub.s32 %s32, %s39
      %p324 = scmp.eq.s32.totalorder %s323, 0
      %s326 = sadd.s32 %s325, 1
      %s327 = scalar_select %p324, %s325, %s326
      %p330 = pneg %p324
      %p331 = scmp.eq.s32.totalorder %s32, 1
      %p332 = por %p330, %p331
      %p333 = scmp.ne.s32.totalorder %s325, %s328
      %p334 = scmp.eq.s32.totalorder %s32, 0
      %p335 = por %p333, %p334
      %p336 = scmp.ne.s32.totalorder %s325, %s328
      %p337 = scmp.eq.s32.totalorder %s37, 1
      %p338 = por %p336, %p337
      %p339 = scmp.ne.s32.totalorder %s328, %s329
      %p340 = scmp.eq.s32.totalorder %s37, 0
      %p341 = por %p339, %p340
      %p342 = scmp.ne.s32.totalorder %s328, %s329
      %p343 = scmp.eq.s32.totalorder %s38, 1
      %p344 = por %p342, %p343
      %p346 = scmp.ne.s32.totalorder %s329, %s345
      %p347 = scmp.eq.s32.totalorder %s38, 0
      %p348 = por %p346, %p347
      %s349 = ssub.s32 %s32, %s39
      %p350 = scmp.eq.s32.totalorder %s349, 0
      %s352 = sadd.s32 %s351, 1
      %s353 = scalar_select %p350, %s351, %s352
      %p356 = pneg %p350
      %p357 = scmp.eq.s32.totalorder %s32, 1
      %p358 = por %p356, %p357
      %p359 = scmp.ne.s32.totalorder %s351, %s354
      %p360 = scmp.eq.s32.totalorder %s32, 0
      %p361 = por %p359, %p360
      %p362 = scmp.ne.s32.totalorder %s351, %s354
      %p363 = scmp.eq.s32.totalorder %s37, 1
      %p364 = por %p362, %p363
      %p365 = scmp.ne.s32.totalorder %s354, %s355
      %p366 = scmp.eq.s32.totalorder %s37, 0
      %p367 = por %p365, %p366
      %p368 = scmp.ne.s32.totalorder %s354, %s355
      %p369 = scmp.eq.s32.totalorder %s38, 1
      %p370 = por %p368, %p369
      %p372 = scmp.ne.s32.totalorder %s355, %s371
      %p373 = scmp.eq.s32.totalorder %s38, 0
      %p374 = por %p372, %p373
      %s375 = ssub.s32 %s32, %s39
      %p376 = scmp.eq.s32.totalorder %s375, 0
      %s378 = sadd.s32 %s377, 1
      %s379 = scalar_select %p376, %s377, %s378
      %p382 = pneg %p376
      %p383 = scmp.eq.s32.totalorder %s32, 1
      %p384 = por %p382, %p383
      %p385 = scmp.ne.s32.totalorder %s377, %s380
      %p386 = scmp.eq.s32.totalorder %s32, 0
      %p387 = por %p385, %p386
      %p388 = scmp.ne.s32.totalorder %s377, %s380
      %p389 = scmp.eq.s32.totalorder %s37, 1
      %p390 = por %p388, %p389
      %p391 = scmp.ne.s32.totalorder %s380, %s381
      %p392 = scmp.eq.s32.totalorder %s37, 0
      %p393 = por %p391, %p392
      %p394 = scmp.ne.s32.totalorder %s380, %s381
      %p395 = scmp.eq.s32.totalorder %s38, 1
      %p396 = por %p394, %p395
      %p398 = scmp.ne.s32.totalorder %s381, %s397
      %p399 = scmp.eq.s32.totalorder %s38, 0
      %p400 = por %p398, %p399
      %p401 = scmp.le.s32.totalorder 1, %s32
      %p402 = scmp.lt.s32.totalorder %s32, 3
      %p403 = pnand %p401, %p402
      %p404 = pneg %p403
      // Predicated region
      $region9: #{encoder_forward.1} parent=5 // pred_check
        _
      $region10: #{encoder_forward.1} parent=5 // pred_check_branch
        %406 = sbr.rel (%p403) target = $region12
      $region11: #{encoder_forward.1} parent=5 // pred_region
        %s407 = ssub.s32 %s32, 1
        // Predicated region
        $region13: #{encoder_forward.1} parent=11 // pred_check
          %p408 = pneg %p79
        $region14: #{encoder_forward.1} parent=11 // pred_check_branch
          %410 = sbr.rel (%p408) target = $region16
        $region15: #{encoder_forward.1} parent=11 // pred_region
          _
        $region16: #{encoder_forward.1} parent=11 // pred_fallthru
          _
        // Predicated region
        $region17: #{encoder_forward.1} parent=11 // pred_check
          %p411 = pneg %p100
        $region18: #{encoder_forward.1} parent=11 // pred_check_branch
          %413 = sbr.rel (%p411) target = $region20
        $region19: #{encoder_forward.1} parent=11 // pred_region
          _
        $region20: #{encoder_forward.1} parent=11 // pred_fallthru
          _
        // Predicated region
        $region21: #{encoder_forward.1} parent=11 // pred_check
          %p414 = pneg %p121
        $region22: #{encoder_forward.1} parent=11 // pred_check_branch
          %416 = sbr.rel (%p414) target = $region24
        $region23: #{encoder_forward.1} parent=11 // pred_region
          %418 = vsyncadd [#allocation3], 0
          %s420 = sshll.u32 %s3, 4
          %s421 = int_to_ptr.hbm [resolvable:$true] %s420
          %s422 = sshll.u32 [#allocation2], 4
          %s423 = int_to_ptr.vmem [resolvable:$true] %s422
          %425 = dma.hbm_to_vmem [thread:$0]  %s421, 32, %s423, [#allocation3]
        $region24: #{encoder_forward.1} parent=11 // pred_fallthru
          _
        // Predicated region
        $region25: #{encoder_forward.1} parent=11 // pred_check
          %p426 = pneg %p142
        $region26: #{encoder_forward.1} parent=11 // pred_check_branch
          %428 = sbr.rel (%p426) target = $region28
        $region27: #{encoder_forward.1} parent=11 // pred_region
          %430 = vsyncadd [#allocation6], 0
          %s431 = sshll.u32 %s4, 4
          %s432 = int_to_ptr.hbm [resolvable:$true] %s431
          %s433 = sshll.u32 [#allocation5], 4
          %s434 = int_to_ptr.vmem [resolvable:$true] %s433
          %439 = dma.hbm_to_vmem [thread:$0]  %s432, 48, %s434, [#allocation6], 16, 16, 1
        $region28: #{encoder_forward.1} parent=11 // pred_fallthru
          _
        // Predicated region
        $region29: #{encoder_forward.1} parent=11 // pred_check
          %p440 = pneg %p163
        $region30: #{encoder_forward.1} parent=11 // pred_check_branch
          %442 = sbr.rel (%p440) target = $region32
        $region31: #{encoder_forward.1} parent=11 // pred_region
          _
        $region32: #{encoder_forward.1} parent=11 // pred_fallthru
          _
        // Predicated region
        $region33: #{encoder_forward.1} parent=11 // pred_check
          %p443 = pneg %p184
        $region34: #{encoder_forward.1} parent=11 // pred_check_branch
          %445 = sbr.rel (%p443) target = $region36
        $region35: #{encoder_forward.1} parent=11 // pred_region
          %447 = vsyncadd [#allocation6], 0
          %s449 = sshll.u32 %s6, 4
          %s450 = int_to_ptr.hbm [resolvable:$true] %s449
          %s451 = sshll.u32 [#allocation7], 4
          %s452 = int_to_ptr.vmem [resolvable:$true] %s451
          %454 = dma.hbm_to_vmem [thread:$0]  %s450, 16, %s452, [#allocation6]
        $region36: #{encoder_forward.1} parent=11 // pred_fallthru
          _
        // Predicated region
        $region37: #{encoder_forward.1} parent=11 // pred_check
          %p455 = pneg %p205
        $region38: #{encoder_forward.1} parent=11 // pred_check_branch
          %457 = sbr.rel (%p455) target = $region40
        $region39: #{encoder_forward.1} parent=11 // pred_region
          _
        $region40: #{encoder_forward.1} parent=11 // pred_fallthru
          _
        // Predicated region
        $region41: #{encoder_forward.1} parent=11 // pred_check
          %p458 = pneg %p226
        $region42: #{encoder_forward.1} parent=11 // pred_check_branch
          %460 = sbr.rel (%p458) target = $region44
        $region43: #{encoder_forward.1} parent=11 // pred_region
          %462 = vsyncadd [#allocation9], 0
          %s463 = sshll.u32 %s8, 4
          %s464 = int_to_ptr.hbm [resolvable:$true] %s463
          %s465 = sshll.u32 [#allocation8], 4
          %s466 = int_to_ptr.vmem [resolvable:$true] %s465
          %471 = dma.hbm_to_vmem [thread:$0]  %s464, 3072, %s466, [#allocation9], 64, 64, 4
        $region44: #{encoder_forward.1} parent=11 // pred_fallthru
          _
        // Predicated region
        $region45: #{encoder_forward.1} parent=11 // pred_check
          %p472 = pneg %p247
        $region46: #{encoder_forward.1} parent=11 // pred_check_branch
          %474 = sbr.rel (%p472) target = $region48
        $region47: #{encoder_forward.1} parent=11 // pred_region
          %476 = vsyncadd [#allocation9], 0
          %s478 = sshll.u32 %s9, 4
          %s479 = int_to_ptr.hbm [resolvable:$true] %s478
          %s480 = sshll.u32 [#allocation10], 4
          %s481 = int_to_ptr.vmem [resolvable:$true] %s480
          %483 = dma.hbm_to_vmem [thread:$0]  %s479, 16, %s481, [#allocation9]
        $region48: #{encoder_forward.1} parent=11 // pred_fallthru
          _
        // Predicated region
        $region49: #{encoder_forward.1} parent=11 // pred_check
          %p484 = pneg %p268
        $region50: #{encoder_forward.1} parent=11 // pred_check_branch
          %486 = sbr.rel (%p484) target = $region52
        $region51: #{encoder_forward.1} parent=11 // pred_region
          _
        $region52: #{encoder_forward.1} parent=11 // pred_fallthru
          _
        // Predicated region
        $region53: #{encoder_forward.1} parent=11 // pred_check
          %p487 = pneg %p289
        $region54: #{encoder_forward.1} parent=11 // pred_check_branch
          %489 = sbr.rel (%p487) target = $region56
        $region55: #{encoder_forward.1} parent=11 // pred_region
          %491 = vsyncadd [#allocation12], 0
          %s493 = sshll.u32 %s11, 4
          %s494 = int_to_ptr.hbm [resolvable:$true] %s493
          %s495 = sshll.u32 [#allocation11], 4
          %s496 = int_to_ptr.vmem [resolvable:$true] %s495
          %498 = dma.hbm_to_vmem [thread:$0]  %s494, 16, %s496, [#allocation12]
        $region56: #{encoder_forward.1} parent=11 // pred_fallthru
          _
      $region12: #{encoder_forward.1} parent=5 // pred_fallthru
        _
      %p499 = scmp.lt.s32.totalorder %s32, 2
      // Predicated region
      $region57: #{encoder_forward.1} parent=5 // pred_check
        %p500 = pneg %p499
      $region58: #{encoder_forward.1} parent=5 // pred_check_branch
        %502 = sbr.rel (%p500) target = $region60
      $region59: #{encoder_forward.1} parent=5 // pred_region
        // Predicated region
        $region61: #{encoder_forward.1} parent=59 // pred_check
          %p503 = pneg %p52
        $region62: #{encoder_forward.1} parent=59 // pred_check_branch
          %505 = sbr.rel (%p503) target = $region64
        $region63: #{encoder_forward.1} parent=59 // pred_region
          %p506 = scmp.lt.s32.totalorder %s32, 1
          %s507 = scalar_select %p506, %s32, 1
          %s508 = smul.addr %s507, 4
          %s509 = smul.addr %s508, 4
          %s510 = scalar_lea.vmem %s0, %s509
        $region64: #{encoder_forward.1} parent=59 // pred_fallthru
          _
        // Predicated region
        $region65: #{encoder_forward.1} parent=59 // pred_check
          %p511 = pneg %p309
        $region66: #{encoder_forward.1} parent=59 // pred_check_branch
          %513 = sbr.rel (%p511) target = $region68
        $region67: #{encoder_forward.1} parent=59 // pred_region
          %s514 = sand.u32 %s32, 1
          %s515 = scalar_lea.sflag [#allocation3], %s514
          %s516 = sand.u32 %s299, 1
          %s517 = scalar_lea.vmem [#allocation13], %s516
          %519 = vsyncadd %s515, 0
          %s520 = scalar_lea.hbm %s12, %s32
          %s522 = sshll.u32 %s520, 4
          %s523 = int_to_ptr.hbm [resolvable:$true] %s522
          %s524 = sshll.u32 %s517, 4
          %s525 = int_to_ptr.vmem [resolvable:$true] %s524
          %527 = dma.hbm_to_vmem [thread:$0]  %s523, 16, %s525, %s515
        $region68: #{encoder_forward.1} parent=59 // pred_fallthru
          _
      $region60: #{encoder_forward.1} parent=5 // pred_fallthru
        _
      %p528 = scmp.le.s32.totalorder 1, %s32
      %p529 = scmp.lt.s32.totalorder %s32, 3
      %p530 = pnand %p528, %p529
      %p531 = pneg %p530
      // Predicated region
      $region69: #{encoder_forward.1} parent=5 // pred_check
        _
      $region70: #{encoder_forward.1} parent=5 // pred_check_branch
        %533 = sbr.rel (%p530) target = $region72
      $region71: #{encoder_forward.1} parent=5 // pred_region
        %s534 = ssub.s32 %s32, 1
        // Predicated region
        $region73: #{encoder_forward.1} parent=71 // pred_check
          %p535 = pneg %p121
        $region74: #{encoder_forward.1} parent=71 // pred_check_branch
          %537 = sbr.rel (%p535) target = $region76
        $region75: #{encoder_forward.1} parent=71 // pred_region
          %539 = dma.done [#allocation3], 32
        $region76: #{encoder_forward.1} parent=71 // pred_fallthru
          _
        // Predicated region
        $region77: #{encoder_forward.1} parent=71 // pred_check
          %p540 = pneg %p142
        $region78: #{encoder_forward.1} parent=71 // pred_check_branch
          %542 = sbr.rel (%p540) target = $region80
        $region79: #{encoder_forward.1} parent=71 // pred_region
          %544 = dma.done [#allocation6], 48
        $region80: #{encoder_forward.1} parent=71 // pred_fallthru
          _
        // Predicated region
        $region81: #{encoder_forward.1} parent=71 // pred_check
          %p545 = pneg %p184
        $region82: #{encoder_forward.1} parent=71 // pred_check_branch
          %547 = sbr.rel (%p545) target = $region84
        $region83: #{encoder_forward.1} parent=71 // pred_region
          %549 = dma.done [#allocation6], 16
        $region84: #{encoder_forward.1} parent=71 // pred_fallthru
          _
        // Predicated region
        $region85: #{encoder_forward.1} parent=71 // pred_check
          %p550 = pneg %p226
        $region86: #{encoder_forward.1} parent=71 // pred_check_branch
          %552 = sbr.rel (%p550) target = $region88
        $region87: #{encoder_forward.1} parent=71 // pred_region
          %554 = dma.done [#allocation9], 3072
        $region88: #{encoder_forward.1} parent=71 // pred_fallthru
          _
        // Predicated region
        $region89: #{encoder_forward.1} parent=71 // pred_check
          %p555 = pneg %p247
        $region90: #{encoder_forward.1} parent=71 // pred_check_branch
          %557 = sbr.rel (%p555) target = $region92
        $region91: #{encoder_forward.1} parent=71 // pred_region
          %559 = dma.done [#allocation9], 16
        $region92: #{encoder_forward.1} parent=71 // pred_fallthru
          _
        // Predicated region
        $region93: #{encoder_forward.1} parent=71 // pred_check
          %p560 = pneg %p289
        $region94: #{encoder_forward.1} parent=71 // pred_check_branch
          %562 = sbr.rel (%p560) target = $region96
        $region95: #{encoder_forward.1} parent=71 // pred_region
          %564 = dma.done [#allocation12], 16
        $region96: #{encoder_forward.1} parent=71 // pred_fallthru
          _
        %s565 = sand.u32 %s37, 1
        %s566 = scalar_lea.sflag [#allocation3], %s565
        %s567 = sand.u32 %s302, 1
        %s568 = scalar_lea.vmem [#allocation13], %s567
        // Predicated region
        $region97: #{encoder_forward.1} parent=71 // pred_check
          %p569 = pneg %p315
        $region98: #{encoder_forward.1} parent=71 // pred_check_branch
          %571 = sbr.rel (%p569) target = $region100
        $region99: #{encoder_forward.1} parent=71 // pred_region
          %573 = dma.done %s566, 16
        $region100: #{encoder_forward.1} parent=71 // pred_fallthru
          _
        %p574 = scmp.lt.s32.totalorder %s37, 1
        %s575 = scalar_select %p574, %s37, 1
        %s576 = smul.addr %s575, 4
        %s577 = smul.addr %s576, 4
        %s578 = scalar_lea.vmem %s0, %s577
        %p579 = pneg %p58
        %p580 = pneg %p55
        %p581 = pneg %p79
        %p582 = pneg %p76
        %p583 = pneg %p100
        %p584 = pneg %p97
        %p585 = pneg %p121
        %p586 = pneg %p118
        %p587 = pneg %p142
        %p588 = pneg %p139
        %p589 = pneg %p163
        %p590 = pneg %p160
        %p591 = pneg %p184
        %p592 = pneg %p181
        %p593 = pneg %p205
        %p594 = pneg %p202
        %p595 = pneg %p226
        %p596 = pneg %p223
        %p597 = pneg %p247
        %p598 = pneg %p244
        %p599 = pneg %p268
        %p600 = pneg %p265
        %p601 = pneg %p289
        %p602 = pneg %p286
        %s603 = sand.u32 %s37, 1
        %s604 = scalar_lea.sflag [#allocation3], %s603
        %s605 = sand.u32 %s302, 1
        %s606 = scalar_lea.vmem [#allocation13], %s605
        %p607 = pneg %p315
        %p608 = pneg %p312
        %p609 = pneg %p341
        %p610 = pneg %p338
        %s611 = sand.u32 %s328, 1
        %s612 = scalar_lea.sflag [#allocation4], %s611
        %s613 = sand.u32 %s328, 1
        %s614 = scalar_lea.vmem [#allocation14], %s613
        %p615 = pneg %p367
        %p616 = pneg %p364
        %s617 = sand.u32 %s37, 1
        %s618 = scalar_lea.sflag [#allocation16], %s617
        %s619 = sand.u32 %s354, 1
        %s620 = scalar_lea.vmem [#allocation15], %s619
        %p621 = pneg %p393
        %p622 = pneg %p390
        %s623 = sand.u32 %s37, 1
        %s624 = scalar_lea.sflag [#allocation16], %s623
        %s625 = sand.u32 %s380, 1
        %s626 = scalar_lea.vmem [#allocation17], %s625
        %p627 = scmp.lt.s32.totalorder %s37, 1
        %s628 = scalar_select %p627, %s37, 1
        %s629 = smul.addr %s628, 4
        %s630 = smul.addr %s629, 4
        %s631 = scalar_lea.vmem %s0, %s630
        %v633 = vld [vmem:[%s631] sm:$0xf]
        %v634 = vld [vmem:[%s631 + $0x4] sm:$0xf]
        %v635 = vld [vmem:[%s631 + $0x8] sm:$0xf]
        %v636 = vld [vmem:[%s631 + $0xc] sm:$0xf]
        %v637 = vld [vmem:[%s1] sm:$0xf]
        %v642 = vunpack.c.l.b16 %v633
        %v643 = vunpack.c.l.b16 %v634
        %v644 = vunpack.c.l.b16 %v635
        %v645 = vunpack.c.l.b16 %v636
        %v646 = vpack.c.b16 %v643, %v642
        %v647 = vpack.c.b16 %v645, %v644
        %vm650 = vcmask 261120
        %v652 = vsel %vm650, %v637, 0
        %654 = vmatpush.bf16.msra.mxu0 0
        %655 = vmatpush.bf16.msra.mxu0 0
        %656 = vmatpush.bf16.msra.mxu0 0
        %657 = vmatpush.bf16.msra.mxu0 0
        %658 = vmatpush.bf16.msra.mxu0 0
        %659 = vmatpush.bf16.msra.mxu0 0
        %660 = vmatpush.bf16.msra.mxu0 %v647
        %661 = vmatpush.bf16.msra.mxu0 %v646
        %662 = vmatmul.bf16.gmra.mxu0 %v652
        %v663 = vpop.f32.mrf.mxu0
        %v664 = vadd.f32 0.0, %v663
        %v665 = vpop.f32.mrf.mxu0
        %666 = vdwg.mxu0
        %v667 = vpack.c.bf16 %v664, %v664
        %v668 = vld [vmem:[%s2] sm:$0xff]
        %v669 = vld [vmem:[%s2 + $0x8] sm:$0xff]
        %v670 = vld [vmem:[%s2 + $0x10] sm:$0xff]
        %v671 = vld [vmem:[%s2 + $0x18] sm:$0xff]
        %v672 = vld [vmem:[%s2 + $0x20] sm:$0xff]
        %v673 = vld [vmem:[%s2 + $0x28] sm:$0xff]
        %v674 = vld [vmem:[%s2 + $0x30] sm:$0xff]
        %v675 = vld [vmem:[%s2 + $0x38] sm:$0xff]
        %v676 = vld [vmem:[%s2 + $0x40] sm:$0xff]
        %v677 = vld [vmem:[%s2 + $0x48] sm:$0xff]
        %v678 = vld [vmem:[%s2 + $0x50] sm:$0xff]
        %v679 = vld [vmem:[%s2 + $0x58] sm:$0xff]
        %s680 = scalar_lea.vmem %s1, 4
        %v681 = vld [vmem:[%s680] sm:$0xf]
        %v683 = vsel %vm650, %v681, 0
        %685 = vmatpush.bf16.msra.mxu0 0
        %686 = vmatpush.bf16.msra.mxu0 0
        %687 = vmatpush.bf16.msra.mxu0 0
        %688 = vmatpush.bf16.msra.mxu0 0
        %689 = vmatpush.bf16.msra.mxu0 0
        %690 = vmatpush.bf16.msra.mxu0 0
        %691 = vmatpush.bf16.msra.mxu0 %v647
        %692 = vmatpush.bf16.msra.mxu0 %v646
        %693 = vmatmul.bf16.gmra.mxu0 %v683
        %v694 = vpop.f32.mrf.mxu0
        %v695 = vadd.f32 0.0, %v694
        %v696 = vpop.f32.mrf.mxu0
        %697 = vdwg.mxu0
        %v698 = vpack.c.bf16 %v695, %v695
        %s699 = scalar_lea.vmem %s2, 96
        %v700 = vld [vmem:[%s699] sm:$0xff]
        %v701 = vld [vmem:[%s699 + $0x8] sm:$0xff]
        %v702 = vld [vmem:[%s699 + $0x10] sm:$0xff]
        %v703 = vld [vmem:[%s699 + $0x18] sm:$0xff]
        %v704 = vld [vmem:[%s699 + $0x20] sm:$0xff]
        %v705 = vld [vmem:[%s699 + $0x28] sm:$0xff]
        %v706 = vld [vmem:[%s699 + $0x30] sm:$0xff]
        %v707 = vld [vmem:[%s699 + $0x38] sm:$0xff]
        %v708 = vld [vmem:[%s699 + $0x40] sm:$0xff]
        %v709 = vld [vmem:[%s699 + $0x48] sm:$0xff]
        %v710 = vld [vmem:[%s699 + $0x50] sm:$0xff]
        %v711 = vld [vmem:[%s699 + $0x58] sm:$0xff]
        %v724 = vunpack.c.l.b16 %v700
        %v725 = vunpack.c.h.b16 %v700
        %v726 = vunpack.c.l.b16 %v701
        %v727 = vunpack.c.h.b16 %v701
        %v728 = vunpack.c.l.b16 %v702
        %v729 = vunpack.c.h.b16 %v702
        %v730 = vunpack.c.l.b16 %v703
        %v731 = vunpack.c.h.b16 %v703
        %v732 = vunpack.c.l.b16 %v704
        %v733 = vunpack.c.h.b16 %v704
        %v734 = vunpack.c.l.b16 %v705
        %v735 = vunpack.c.h.b16 %v705
        %v736 = vunpack.c.l.b16 %v706
        %v737 = vunpack.c.h.b16 %v706
        %v738 = vunpack.c.l.b16 %v707
        %v739 = vunpack.c.h.b16 %v707
        %v740 = vunpack.c.l.b16 %v708
        %v741 = vunpack.c.h.b16 %v708
        %v742 = vunpack.c.l.b16 %v709
        %v743 = vunpack.c.h.b16 %v709
        %v744 = vunpack.c.l.b16 %v710
        %v745 = vunpack.c.h.b16 %v710
        %v746 = vunpack.c.l.b16 %v711
        %v747 = vunpack.c.h.b16 %v711
        %v748 = vpack.c.b16 %v726, %v724
        %v749 = vpack.c.b16 %v727, %v725
        %v750 = vpack.c.b16 %v730, %v728
        %v751 = vpack.c.b16 %v731, %v729
        %v752 = vpack.c.b16 %v734, %v732
        %v753 = vpack.c.b16 %v735, %v733
        %v754 = vpack.c.b16 %v738, %v736
        %v755 = vpack.c.b16 %v739, %v737
        %v756 = vpack.c.b16 %v742, %v740
        %v757 = vpack.c.b16 %v743, %v741
        %v758 = vpack.c.b16 %v746, %v744
        %v759 = vpack.c.b16 %v747, %v745
        %vm772 = vcmask 785408
        %v774 = vsel %vm772, %v698, 0
        %776 = vmatpush.bf16.msra.mxu0 0
        %777 = vmatpush.bf16.msra.mxu0 0
        %778 = vmatpush.bf16.msra.mxu0 %v758
        %779 = vmatpush.bf16.msra.mxu0 %v756
        %780 = vmatpush.bf16.msra.mxu0 %v754
        %781 = vmatpush.bf16.msra.mxu0 %v752
        %782 = vmatpush.bf16.msra.mxu0 %v750
        %783 = vmatpush.bf16.msra.mxu0 %v748
        %784 = vmatmul.bf16.gmra.mxu0 %v774
        %v785 = vpop.f32.mrf.mxu0
        %v786 = vadd.f32 0.0, %v785
        %v787 = vpop.f32.mrf.mxu0
        %788 = vdwg.mxu0
        %789 = vmatpush.bf16.msra.mxu0 0
        %790 = vmatpush.bf16.msra.mxu0 0
        %791 = vmatpush.bf16.msra.mxu0 %v759
        %792 = vmatpush.bf16.msra.mxu0 %v757
        %793 = vmatpush.bf16.msra.mxu0 %v755
        %794 = vmatpush.bf16.msra.mxu0 %v753
        %795 = vmatpush.bf16.msra.mxu0 %v751
        %796 = vmatpush.bf16.msra.mxu0 %v749
        %797 = vmatmul.bf16.gmra.mxu0 %v774
        %v798 = vpop.f32.mrf.mxu0
        %v799 = vadd.f32 0.0, %v798
        %v800 = vpop.f32.mrf.mxu0
        %801 = vdwg.mxu0
        %v814 = vunpack.c.l.b16 %v668
        %v815 = vunpack.c.h.b16 %v668
        %v816 = vunpack.c.l.b16 %v669
        %v817 = vunpack.c.h.b16 %v669
        %v818 = vunpack.c.l.b16 %v670
        %v819 = vunpack.c.h.b16 %v670
        %v820 = vunpack.c.l.b16 %v671
        %v821 = vunpack.c.h.b16 %v671
        %v822 = vunpack.c.l.b16 %v672
        %v823 = vunpack.c.h.b16 %v672
        %v824 = vunpack.c.l.b16 %v673
        %v825 = vunpack.c.h.b16 %v673
        %v826 = vunpack.c.l.b16 %v674
        %v827 = vunpack.c.h.b16 %v674
        %v828 = vunpack.c.l.b16 %v675
        %v829 = vunpack.c.h.b16 %v675
        %v830 = vunpack.c.l.b16 %v676
        %v831 = vunpack.c.h.b16 %v676
        %v832 = vunpack.c.l.b16 %v677
        %v833 = vunpack.c.h.b16 %v677
        %v834 = vunpack.c.l.b16 %v678
        %v835 = vunpack.c.h.b16 %v678
        %v836 = vunpack.c.l.b16 %v679
        %v837 = vunpack.c.h.b16 %v679
        %v838 = vpack.c.b16 %v816, %v814
        %v839 = vpack.c.b16 %v817, %v815
        %v840 = vpack.c.b16 %v820, %v818
        %v841 = vpack.c.b16 %v821, %v819
        %v842 = vpack.c.b16 %v824, %v822
        %v843 = vpack.c.b16 %v825, %v823
        %v844 = vpack.c.b16 %v828, %v826
        %v845 = vpack.c.b16 %v829, %v827
        %v846 = vpack.c.b16 %v832, %v830
        %v847 = vpack.c.b16 %v833, %v831
        %v848 = vpack.c.b16 %v836, %v834
        %v849 = vpack.c.b16 %v837, %v835
        %v863 = vsel %vm772, %v667, 0
        %865 = vmatpush.bf16.msra.mxu0 0
        %866 = vmatpush.bf16.msra.mxu0 0
        %867 = vmatpush.bf16.msra.mxu0 %v848
        %868 = vmatpush.bf16.msra.mxu0 %v846
        %869 = vmatpush.bf16.msra.mxu0 %v844
        %870 = vmatpush.bf16.msra.mxu0 %v842
        %871 = vmatpush.bf16.msra.mxu0 %v840
        %872 = vmatpush.bf16.msra.mxu0 %v838
        %873 = vmatmul.bf16.gmra.mxu0 %v863
        %v874 = vpop.f32.mrf.mxu0
        %v875 = vadd.f32 %v786, %v874
        %v876 = vpop.f32.mrf.mxu0
        %877 = vdwg.mxu0
        %878 = vmatpush.bf16.msra.mxu0 0
        %879 = vmatpush.bf16.msra.mxu0 0
        %880 = vmatpush.bf16.msra.mxu0 %v849
        %881 = vmatpush.bf16.msra.mxu0 %v847
        %882 = vmatpush.bf16.msra.mxu0 %v845
        %883 = vmatpush.bf16.msra.mxu0 %v843
        %884 = vmatpush.bf16.msra.mxu0 %v841
        %885 = vmatpush.bf16.msra.mxu0 %v839
        %886 = vmatmul.bf16.gmra.mxu0 %v863
        %v887 = vpop.f32.mrf.mxu0
        %v888 = vadd.f32 %v799, %v887
        %v889 = vpop.f32.mrf.mxu0
        %890 = vdwg.mxu0
        %s891 = scalar_lea.vmem %s1, 8
        %v892 = vld [vmem:[%s891] sm:$0xf]
        %v894 = vsel %vm650, %v892, 0
        %896 = vmatpush.bf16.msra.mxu0 0
        %897 = vmatpush.bf16.msra.mxu0 0
        %898 = vmatpush.bf16.msra.mxu0 0
        %899 = vmatpush.bf16.msra.mxu0 0
        %900 = vmatpush.bf16.msra.mxu0 0
        %901 = vmatpush.bf16.msra.mxu0 0
        %902 = vmatpush.bf16.msra.mxu0 %v647
        %903 = vmatpush.bf16.msra.mxu0 %v646
        %904 = vmatmul.bf16.gmra.mxu0 %v894
        %v905 = vpop.f32.mrf.mxu0
        %v906 = vadd.f32 0.0, %v905
        %v907 = vpop.f32.mrf.mxu0
        %908 = vdwg.mxu0
        %v909 = vpack.c.bf16 %v906, %v906
        %s910 = scalar_lea.vmem %s2, 192
        %v911 = vld [vmem:[%s910] sm:$0xff]
        %v912 = vld [vmem:[%s910 + $0x8] sm:$0xff]
        %v913 = vld [vmem:[%s910 + $0x10] sm:$0xff]
        %v914 = vld [vmem:[%s910 + $0x18] sm:$0xff]
        %v915 = vld [vmem:[%s910 + $0x20] sm:$0xff]
        %v916 = vld [vmem:[%s910 + $0x28] sm:$0xff]
        %v917 = vld [vmem:[%s910 + $0x30] sm:$0xff]
        %v918 = vld [vmem:[%s910 + $0x38] sm:$0xff]
        %v919 = vld [vmem:[%s910 + $0x40] sm:$0xff]
        %v920 = vld [vmem:[%s910 + $0x48] sm:$0xff]
        %v921 = vld [vmem:[%s910 + $0x50] sm:$0xff]
        %v922 = vld [vmem:[%s910 + $0x58] sm:$0xff]
        %v935 = vunpack.c.l.b16 %v911
        %v936 = vunpack.c.h.b16 %v911
        %v937 = vunpack.c.l.b16 %v912
        %v938 = vunpack.c.h.b16 %v912
        %v939 = vunpack.c.l.b16 %v913
        %v940 = vunpack.c.h.b16 %v913
        %v941 = vunpack.c.l.b16 %v914
        %v942 = vunpack.c.h.b16 %v914
        %v943 = vunpack.c.l.b16 %v915
        %v944 = vunpack.c.h.b16 %v915
        %v945 = vunpack.c.l.b16 %v916
        %v946 = vunpack.c.h.b16 %v916
        %v947 = vunpack.c.l.b16 %v917
        %v948 = vunpack.c.h.b16 %v917
        %v949 = vunpack.c.l.b16 %v918
        %v950 = vunpack.c.h.b16 %v918
        %v951 = vunpack.c.l.b16 %v919
        %v952 = vunpack.c.h.b16 %v919
        %v953 = vunpack.c.l.b16 %v920
        %v954 = vunpack.c.h.b16 %v920
        %v955 = vunpack.c.l.b16 %v921
        %v956 = vunpack.c.h.b16 %v921
        %v957 = vunpack.c.l.b16 %v922
        %v958 = vunpack.c.h.b16 %v922
        %v959 = vpack.c.b16 %v937, %v935
        %v960 = vpack.c.b16 %v938, %v936
        %v961 = vpack.c.b16 %v941, %v939
        %v962 = vpack.c.b16 %v942, %v940
        %v963 = vpack.c.b16 %v945, %v943
        %v964 = vpack.c.b16 %v946, %v944
        %v965 = vpack.c.b16 %v949, %v947
        %v966 = vpack.c.b16 %v950, %v948
        %v967 = vpack.c.b16 %v953, %v951
        %v968 = vpack.c.b16 %v954, %v952
        %v969 = vpack.c.b16 %v957, %v955
        %v970 = vpack.c.b16 %v958, %v956
        %v984 = vsel %vm772, %v909, 0
        %986 = vmatpush.bf16.msra.mxu0 0
        %987 = vmatpush.bf16.msra.mxu0 0
        %988 = vmatpush.bf16.msra.mxu0 %v969
        %989 = vmatpush.bf16.msra.mxu0 %v967
        %990 = vmatpush.bf16.msra.mxu0 %v965
        %991 = vmatpush.bf16.msra.mxu0 %v963
        %992 = vmatpush.bf16.msra.mxu0 %v961
        %993 = vmatpush.bf16.msra.mxu0 %v959
        %994 = vmatmul.bf16.gmra.mxu0 %v984
        %v995 = vpop.f32.mrf.mxu0
        %v996 = vadd.f32 0.0, %v995
        %v997 = vpop.f32.mrf.mxu0
        %998 = vdwg.mxu0
        %999 = vmatpush.bf16.msra.mxu0 0
        %1000 = vmatpush.bf16.msra.mxu0 0
        %1001 = vmatpush.bf16.msra.mxu0 %v970
        %1002 = vmatpush.bf16.msra.mxu0 %v968
        %1003 = vmatpush.bf16.msra.mxu0 %v966
        %1004 = vmatpush.bf16.msra.mxu0 %v964
        %1005 = vmatpush.bf16.msra.mxu0 %v962
        %1006 = vmatpush.bf16.msra.mxu0 %v960
        %1007 = vmatmul.bf16.gmra.mxu0 %v984
        %v1008 = vpop.f32.mrf.mxu0
        %v1009 = vadd.f32 0.0, %v1008
        %v1010 = vpop.f32.mrf.mxu0
        %1011 = vdwg.mxu0
        %v1012 = vadd.f32 %v875, %v996
        %v1013 = vadd.f32 %v888, %v1009
        %v1014 = vld [vmem:[#allocation2] sm:$0x3]
        %v1016 = vperm.slane %v1014, 0
        %v1017 = vperm.slane %v1014, 1
        %v1020 = vadd.f32 %v1012, %v1016
        %v1021 = vadd.f32 %v1013, %v1017
        %v1022 = vmax.f32 %v1020, 0.0
        %v1023 = vmax.f32 %v1021, 0.0
        %v1024 = vpack.c.bf16 %v1022, %v1022
        %v1025 = vpack.c.bf16 %v1023, %v1023
        %v1026 = vld [vmem:[#allocation5] sm:$0x1]
        %vm1027 = vcmask 64512
        %v1029 = vsel %vm1027, %v1026, 0
        %vm1031 = vcmask 1043456
        %v1033 = vsel %vm1031, %v1024, 0
        %v1036 = vsel %vm1031, %v1025, 0
        %1038 = vmatpush.bf16.msra.mxu0 0
        %1039 = vmatpush.bf16.msra.mxu0 0
        %1040 = vmatpush.bf16.msra.mxu0 0
        %1041 = vmatpush.bf16.msra.mxu0 0
        %1042 = vmatpush.bf16.msra.mxu0 0
        %1043 = vmatpush.bf16.msra.mxu0 0
        %1044 = vmatpush.bf16.msra.mxu0 0
        %1045 = vmatpush.bf16.msra.mxu0 %v1033
        %1046 = vmatmul.bf16.gmra.mxu0 %v1029
        %v1047 = vpop.f32.mrf.mxu0
        %v1048 = vadd.f32 0.0, %v1047
        %v1049 = vpop.f32.mrf.mxu0
        %1050 = vdwg.mxu0
        %1051 = vmatpush.bf16.msra.mxu0 0
        %1052 = vmatpush.bf16.msra.mxu0 0
        %1053 = vmatpush.bf16.msra.mxu0 0
        %1054 = vmatpush.bf16.msra.mxu0 0
        %1055 = vmatpush.bf16.msra.mxu0 0
        %1056 = vmatpush.bf16.msra.mxu0 0
        %1057 = vmatpush.bf16.msra.mxu0 0
        %1058 = vmatpush.bf16.msra.mxu0 %v1036
        %1059 = vmatmul.bf16.gmra.mxu0 %v1029
        %v1060 = vpop.f32.mrf.mxu0
        %v1061 = vadd.f32 0.0, %v1060
        %v1062 = vpop.f32.mrf.mxu0
        %1063 = vdwg.mxu0
        %v1064 = vpack.c.bf16 %v1048, %v1048
        %v1065 = vpack.c.bf16 %v1061, %v1061
        %v1066 = vld [vmem:[%s5] sm:$0xf]
        %v1067 = vld [vmem:[%s5 + $0x4] sm:$0xf]
        %v1068 = vld [vmem:[%s5 + $0x8] sm:$0xf]
        %v1069 = vld [vmem:[%s5 + $0xc] sm:$0xf]
        %v1070 = vld [vmem:[%s5 + $0x10] sm:$0xf]
        %v1071 = vld [vmem:[%s5 + $0x14] sm:$0xf]
        %v1072 = vld [vmem:[%s5 + $0x18] sm:$0xf]
        %v1073 = vld [vmem:[%s5 + $0x1c] sm:$0xf]
        %v1074 = vld [vmem:[%s5 + $0x20] sm:$0xf]
        %v1075 = vld [vmem:[%s5 + $0x24] sm:$0xf]
        %v1076 = vld [vmem:[%s5 + $0x28] sm:$0xf]
        %v1077 = vld [vmem:[%s5 + $0x2c] sm:$0xf]
        %v1078 = vld [vmem:[%s5 + $0x30] sm:$0xf]
        %v1079 = vld [vmem:[%s5 + $0x34] sm:$0xf]
        %v1080 = vld [vmem:[%s5 + $0x38] sm:$0xf]
        %v1081 = vld [vmem:[%s5 + $0x3c] sm:$0xf]
        %v1082 = vld [vmem:[%s5 + $0x40] sm:$0xf]
        %v1083 = vld [vmem:[%s5 + $0x44] sm:$0xf]
        %v1084 = vld [vmem:[%s5 + $0x48] sm:$0xf]
        %v1085 = vld [vmem:[%s5 + $0x4c] sm:$0xf]
        %v1086 = vld [vmem:[%s5 + $0x50] sm:$0xf]
        %v1087 = vld [vmem:[%s5 + $0x54] sm:$0xf]
        %v1088 = vld [vmem:[%s5 + $0x58] sm:$0xf]
        %v1089 = vld [vmem:[%s5 + $0x5c] sm:$0xf]
        %v1090 = vld [vmem:[%s5 + $0x60] sm:$0xf]
        %v1091 = vld [vmem:[%s5 + $0x64] sm:$0xf]
        %v1092 = vld [vmem:[%s5 + $0x68] sm:$0xf]
        %v1093 = vld [vmem:[%s5 + $0x6c] sm:$0xf]
        %v1094 = vld [vmem:[%s5 + $0x70] sm:$0xf]
        %v1095 = vld [vmem:[%s5 + $0x74] sm:$0xf]
        %v1096 = vld [vmem:[%s5 + $0x78] sm:$0xf]
        %v1097 = vld [vmem:[%s5 + $0x7c] sm:$0xf]
        %s1098 = scalar_lea.vmem [#allocation5], 1
        %v1099 = vld [vmem:[%s1098] sm:$0x1]
        %v1101 = vsel %vm1027, %v1099, 0
        %1103 = vmatpush.bf16.msra.mxu0 0
        %1104 = vmatpush.bf16.msra.mxu0 0
        %1105 = vmatpush.bf16.msra.mxu0 0
        %1106 = vmatpush.bf16.msra.mxu0 0
        %1107 = vmatpush.bf16.msra.mxu0 0
        %1108 = vmatpush.bf16.msra.mxu0 0
        %1109 = vmatpush.bf16.msra.mxu0 0
        %1110 = vmatpush.bf16.msra.mxu0 %v1033
        %1111 = vmatmul.bf16.gmra.mxu0 %v1101
        %v1112 = vpop.f32.mrf.mxu0
        %v1113 = vadd.f32 0.0, %v1112
        %v1114 = vpop.f32.mrf.mxu0
        %1115 = vdwg.mxu0
        %1116 = vmatpush.bf16.msra.mxu0 0
        %1117 = vmatpush.bf16.msra.mxu0 0
        %1118 = vmatpush.bf16.msra.mxu0 0
        %1119 = vmatpush.bf16.msra.mxu0 0
        %1120 = vmatpush.bf16.msra.mxu0 0
        %1121 = vmatpush.bf16.msra.mxu0 0
        %1122 = vmatpush.bf16.msra.mxu0 0
        %1123 = vmatpush.bf16.msra.mxu0 %v1036
        %1124 = vmatmul.bf16.gmra.mxu0 %v1101
        %v1125 = vpop.f32.mrf.mxu0
        %v1126 = vadd.f32 0.0, %v1125
        %v1127 = vpop.f32.mrf.mxu0
        %1128 = vdwg.mxu0
        %v1129 = vpack.c.bf16 %v1113, %v1113
        %v1130 = vpack.c.bf16 %v1126, %v1126
        %s1131 = scalar_lea.vmem %s5, 128
        %v1132 = vld [vmem:[%s1131] sm:$0xf]
        %v1133 = vld [vmem:[%s1131 + $0x4] sm:$0xf]
        %v1134 = vld [vmem:[%s1131 + $0x8] sm:$0xf]
        %v1135 = vld [vmem:[%s1131 + $0xc] sm:$0xf]
        %v1136 = vld [vmem:[%s1131 + $0x10] sm:$0xf]
        %v1137 = vld [vmem:[%s1131 + $0x14] sm:$0xf]
        %v1138 = vld [vmem:[%s1131 + $0x18] sm:$0xf]
        %v1139 = vld [vmem:[%s1131 + $0x1c] sm:$0xf]
        %v1140 = vld [vmem:[%s1131 + $0x20] sm:$0xf]
        %v1141 = vld [vmem:[%s1131 + $0x24] sm:$0xf]
        %v1142 = vld [vmem:[%s1131 + $0x28] sm:$0xf]
        %v1143 = vld [vmem:[%s1131 + $0x2c] sm:$0xf]
        %v1144 = vld [vmem:[%s1131 + $0x30] sm:$0xf]
        %v1145 = vld [vmem:[%s1131 + $0x34] sm:$0xf]
        %v1146 = vld [vmem:[%s1131 + $0x38] sm:$0xf]
        %v1147 = vld [vmem:[%s1131 + $0x3c] sm:$0xf]
        %v1148 = vld [vmem:[%s1131 + $0x40] sm:$0xf]
        %v1149 = vld [vmem:[%s1131 + $0x44] sm:$0xf]
        %v1150 = vld [vmem:[%s1131 + $0x48] sm:$0xf]
        %v1151 = vld [vmem:[%s1131 + $0x4c] sm:$0xf]
        %v1152 = vld [vmem:[%s1131 + $0x50] sm:$0xf]
        %v1153 = vld [vmem:[%s1131 + $0x54] sm:$0xf]
        %v1154 = vld [vmem:[%s1131 + $0x58] sm:$0xf]
        %v1155 = vld [vmem:[%s1131 + $0x5c] sm:$0xf]
        %v1156 = vld [vmem:[%s1131 + $0x60] sm:$0xf]
        %v1157 = vld [vmem:[%s1131 + $0x64] sm:$0xf]
        %v1158 = vld [vmem:[%s1131 + $0x68] sm:$0xf]
        %v1159 = vld [vmem:[%s1131 + $0x6c] sm:$0xf]
        %v1160 = vld [vmem:[%s1131 + $0x70] sm:$0xf]
        %v1161 = vld [vmem:[%s1131 + $0x74] sm:$0xf]
        %v1162 = vld [vmem:[%s1131 + $0x78] sm:$0xf]
        %v1163 = vld [vmem:[%s1131 + $0x7c] sm:$0xf]
        %v1196 = vunpack.c.l.b16 %v1132
        %v1197 = vunpack.c.l.b16 %v1133
        %v1198 = vunpack.c.l.b16 %v1134
        %v1199 = vunpack.c.l.b16 %v1135
        %v1200 = vunpack.c.l.b16 %v1136
        %v1201 = vunpack.c.l.b16 %v1137
        %v1202 = vunpack.c.l.b16 %v1138
        %v1203 = vunpack.c.l.b16 %v1139
        %v1204 = vunpack.c.l.b16 %v1140
        %v1205 = vunpack.c.l.b16 %v1141
        %v1206 = vunpack.c.l.b16 %v1142
        %v1207 = vunpack.c.l.b16 %v1143
        %v1208 = vunpack.c.l.b16 %v1144
        %v1209 = vunpack.c.l.b16 %v1145
        %v1210 = vunpack.c.l.b16 %v1146
        %v1211 = vunpack.c.l.b16 %v1147
        %v1212 = vunpack.c.l.b16 %v1148
        %v1213 = vunpack.c.l.b16 %v1149
        %v1214 = vunpack.c.l.b16 %v1150
        %v1215 = vunpack.c.l.b16 %v1151
        %v1216 = vunpack.c.l.b16 %v1152
        %v1217 = vunpack.c.l.b16 %v1153
        %v1218 = vunpack.c.l.b16 %v1154
        %v1219 = vunpack.c.l.b16 %v1155
        %v1220 = vunpack.c.l.b16 %v1156
        %v1221 = vunpack.c.l.b16 %v1157
        %v1222 = vunpack.c.l.b16 %v1158
        %v1223 = vunpack.c.l.b16 %v1159
        %v1224 = vunpack.c.l.b16 %v1160
        %v1225 = vunpack.c.l.b16 %v1161
        %v1226 = vunpack.c.l.b16 %v1162
        %v1227 = vunpack.c.l.b16 %v1163
        %v1228 = vpack.c.b16 %v1197, %v1196
        %v1229 = vpack.c.b16 %v1199, %v1198
        %v1230 = vpack.c.b16 %v1201, %v1200
        %v1231 = vpack.c.b16 %v1203, %v1202
        %v1232 = vpack.c.b16 %v1205, %v1204
        %v1233 = vpack.c.b16 %v1207, %v1206
        %v1234 = vpack.c.b16 %v1209, %v1208
        %v1235 = vpack.c.b16 %v1211, %v1210
        %v1236 = vpack.c.b16 %v1213, %v1212
        %v1237 = vpack.c.b16 %v1215, %v1214
        %v1238 = vpack.c.b16 %v1217, %v1216
        %v1239 = vpack.c.b16 %v1219, %v1218
        %v1240 = vpack.c.b16 %v1221, %v1220
        %v1241 = vpack.c.b16 %v1223, %v1222
        %v1242 = vpack.c.b16 %v1225, %v1224
        %v1243 = vpack.c.b16 %v1227, %v1226
        %1260 = vmatpush.bf16.msra.mxu0 %v1235
        %1261 = vmatpush.bf16.msra.mxu0 %v1234
        %1262 = vmatpush.bf16.msra.mxu0 %v1233
        %1263 = vmatpush.bf16.msra.mxu0 %v1232
        %1264 = vmatpush.bf16.msra.mxu0 %v1231
        %1265 = vmatpush.bf16.msra.mxu0 %v1230
        %1266 = vmatpush.bf16.msra.mxu0 %v1229
        %1267 = vmatpush.bf16.msra.mxu0 %v1228
        %1268 = vmatmul.bf16.gmra.mxu0 %v1129
        %v1269 = vpop.f32.mrf.mxu0
        %v1270 = vadd.f32 0.0, %v1269
        %v1271 = vpop.f32.mrf.mxu0
        %1272 = vdwg.mxu0
        %1273 = vmatpush.bf16.msra.mxu0 %v1243
        %1274 = vmatpush.bf16.msra.mxu0 %v1242
        %1275 = vmatpush.bf16.msra.mxu0 %v1241
        %1276 = vmatpush.bf16.msra.mxu0 %v1240
        %1277 = vmatpush.bf16.msra.mxu0 %v1239
        %1278 = vmatpush.bf16.msra.mxu0 %v1238
        %1279 = vmatpush.bf16.msra.mxu0 %v1237
        %1280 = vmatpush.bf16.msra.mxu0 %v1236
        %1281 = vmatmul.bf16.gmra.mxu0 %v1130
        %v1282 = vpop.f32.mrf.mxu0
        %v1283 = vadd.f32 %v1270, %v1282
        %v1284 = vpop.f32.mrf.mxu0
        %1285 = vdwg.mxu0
        %v1318 = vunpack.c.l.b16 %v1066
        %v1319 = vunpack.c.l.b16 %v1067
        %v1320 = vunpack.c.l.b16 %v1068
        %v1321 = vunpack.c.l.b16 %v1069
        %v1322 = vunpack.c.l.b16 %v1070
        %v1323 = vunpack.c.l.b16 %v1071
        %v1324 = vunpack.c.l.b16 %v1072
        %v1325 = vunpack.c.l.b16 %v1073
        %v1326 = vunpack.c.l.b16 %v1074
        %v1327 = vunpack.c.l.b16 %v1075
        %v1328 = vunpack.c.l.b16 %v1076
        %v1329 = vunpack.c.l.b16 %v1077
        %v1330 = vunpack.c.l.b16 %v1078
        %v1331 = vunpack.c.l.b16 %v1079
        %v1332 = vunpack.c.l.b16 %v1080
        %v1333 = vunpack.c.l.b16 %v1081
        %v1334 = vunpack.c.l.b16 %v1082
        %v1335 = vunpack.c.l.b16 %v1083
        %v1336 = vunpack.c.l.b16 %v1084
        %v1337 = vunpack.c.l.b16 %v1085
        %v1338 = vunpack.c.l.b16 %v1086
        %v1339 = vunpack.c.l.b16 %v1087
        %v1340 = vunpack.c.l.b16 %v1088
        %v1341 = vunpack.c.l.b16 %v1089
        %v1342 = vunpack.c.l.b16 %v1090
        %v1343 = vunpack.c.l.b16 %v1091
        %v1344 = vunpack.c.l.b16 %v1092
        %v1345 = vunpack.c.l.b16 %v1093
        %v1346 = vunpack.c.l.b16 %v1094
        %v1347 = vunpack.c.l.b16 %v1095
        %v1348 = vunpack.c.l.b16 %v1096
        %v1349 = vunpack.c.l.b16 %v1097
        %v1350 = vpack.c.b16 %v1319, %v1318
        %v1351 = vpack.c.b16 %v1321, %v1320
        %v1352 = vpack.c.b16 %v1323, %v1322
        %v1353 = vpack.c.b16 %v1325, %v1324
        %v1354 = vpack.c.b16 %v1327, %v1326
        %v1355 = vpack.c.b16 %v1329, %v1328
        %v1356 = vpack.c.b16 %v1331, %v1330
        %v1357 = vpack.c.b16 %v1333, %v1332
        %v1358 = vpack.c.b16 %v1335, %v1334
        %v1359 = vpack.c.b16 %v1337, %v1336
        %v1360 = vpack.c.b16 %v1339, %v1338
        %v1361 = vpack.c.b16 %v1341, %v1340
        %v1362 = vpack.c.b16 %v1343, %v1342
        %v1363 = vpack.c.b16 %v1345, %v1344
        %v1364 = vpack.c.b16 %v1347, %v1346
        %v1365 = vpack.c.b16 %v1349, %v1348
        %1382 = vmatpush.bf16.msra.mxu0 %v1357
        %1383 = vmatpush.bf16.msra.mxu0 %v1356
        %1384 = vmatpush.bf16.msra.mxu0 %v1355
        %1385 = vmatpush.bf16.msra.mxu0 %v1354
        %1386 = vmatpush.bf16.msra.mxu0 %v1353
        %1387 = vmatpush.bf16.msra.mxu0 %v1352
        %1388 = vmatpush.bf16.msra.mxu0 %v1351
        %1389 = vmatpush.bf16.msra.mxu0 %v1350
        %1390 = vmatmul.bf16.gmra.mxu0 %v1064
        %v1391 = vpop.f32.mrf.mxu0
        %v1392 = vadd.f32 %v1283, %v1391
        %v1393 = vpop.f32.mrf.mxu0
        %1394 = vdwg.mxu0
        %1395 = vmatpush.bf16.msra.mxu0 %v1365
        %1396 = vmatpush.bf16.msra.mxu0 %v1364
        %1397 = vmatpush.bf16.msra.mxu0 %v1363
        %1398 = vmatpush.bf16.msra.mxu0 %v1362
        %1399 = vmatpush.bf16.msra.mxu0 %v1361
        %1400 = vmatpush.bf16.msra.mxu0 %v1360
        %1401 = vmatpush.bf16.msra.mxu0 %v1359
        %1402 = vmatpush.bf16.msra.mxu0 %v1358
        %1403 = vmatmul.bf16.gmra.mxu0 %v1065
        %v1404 = vpop.f32.mrf.mxu0
        %v1405 = vadd.f32 %v1392, %v1404
        %v1406 = vpop.f32.mrf.mxu0
        %1407 = vdwg.mxu0
        %s1408 = scalar_lea.vmem [#allocation5], 2
        %v1409 = vld [vmem:[%s1408] sm:$0x1]
        %v1411 = vsel %vm1027, %v1409, 0
        %1413 = vmatpush.bf16.msra.mxu0 0
        %1414 = vmatpush.bf16.msra.mxu0 0
        %1415 = vmatpush.bf16.msra.mxu0 0
        %1416 = vmatpush.bf16.msra.mxu0 0
        %1417 = vmatpush.bf16.msra.mxu0 0
        %1418 = vmatpush.bf16.msra.mxu0 0
        %1419 = vmatpush.bf16.msra.mxu0 0
        %1420 = vmatpush.bf16.msra.mxu0 %v1033
        %1421 = vmatmul.bf16.gmra.mxu0 %v1411
        %v1422 = vpop.f32.mrf.mxu0
        %v1423 = vadd.f32 0.0, %v1422
        %v1424 = vpop.f32.mrf.mxu0
        %1425 = vdwg.mxu0
        %1426 = vmatpush.bf16.msra.mxu0 0
        %1427 = vmatpush.bf16.msra.mxu0 0
        %1428 = vmatpush.bf16.msra.mxu0 0
        %1429 = vmatpush.bf16.msra.mxu0 0
        %1430 = vmatpush.bf16.msra.mxu0 0
        %1431 = vmatpush.bf16.msra.mxu0 0
        %1432 = vmatpush.bf16.msra.mxu0 0
        %1433 = vmatpush.bf16.msra.mxu0 %v1036
        %1434 = vmatmul.bf16.gmra.mxu0 %v1411
        %v1435 = vpop.f32.mrf.mxu0
        %v1436 = vadd.f32 0.0, %v1435
        %v1437 = vpop.f32.mrf.mxu0
        %1438 = vdwg.mxu0
        %v1439 = vpack.c.bf16 %v1423, %v1423
        %v1440 = vpack.c.bf16 %v1436, %v1436
        %s1441 = scalar_lea.vmem %s5, 256
        %v1442 = vld [vmem:[%s1441] sm:$0xf]
        %v1443 = vld [vmem:[%s1441 + $0x4] sm:$0xf]
        %v1444 = vld [vmem:[%s1441 + $0x8] sm:$0xf]
        %v1445 = vld [vmem:[%s1441 + $0xc] sm:$0xf]
        %v1446 = vld [vmem:[%s1441 + $0x10] sm:$0xf]
        %v1447 = vld [vmem:[%s1441 + $0x14] sm:$0xf]
        %v1448 = vld [vmem:[%s1441 + $0x18] sm:$0xf]
        %v1449 = vld [vmem:[%s1441 + $0x1c] sm:$0xf]
        %v1450 = vld [vmem:[%s1441 + $0x20] sm:$0xf]
        %v1451 = vld [vmem:[%s1441 + $0x24] sm:$0xf]
        %v1452 = vld [vmem:[%s1441 + $0x28] sm:$0xf]
        %v1453 = vld [vmem:[%s1441 + $0x2c] sm:$0xf]
        %v1454 = vld [vmem:[%s1441 + $0x30] sm:$0xf]
        %v1455 = vld [vmem:[%s1441 + $0x34] sm:$0xf]
        %v1456 = vld [vmem:[%s1441 + $0x38] sm:$0xf]
        %v1457 = vld [vmem:[%s1441 + $0x3c] sm:$0xf]
        %v1458 = vld [vmem:[%s1441 + $0x40] sm:$0xf]
        %v1459 = vld [vmem:[%s1441 + $0x44] sm:$0xf]
        %v1460 = vld [vmem:[%s1441 + $0x48] sm:$0xf]
        %v1461 = vld [vmem:[%s1441 + $0x4c] sm:$0xf]
        %v1462 = vld [vmem:[%s1441 + $0x50] sm:$0xf]
        %v1463 = vld [vmem:[%s1441 + $0x54] sm:$0xf]
        %v1464 = vld [vmem:[%s1441 + $0x58] sm:$0xf]
        %v1465 = vld [vmem:[%s1441 + $0x5c] sm:$0xf]
        %v1466 = vld [vmem:[%s1441 + $0x60] sm:$0xf]
        %v1467 = vld [vmem:[%s1441 + $0x64] sm:$0xf]
        %v1468 = vld [vmem:[%s1441 + $0x68] sm:$0xf]
        %v1469 = vld [vmem:[%s1441 + $0x6c] sm:$0xf]
        %v1470 = vld [vmem:[%s1441 + $0x70] sm:$0xf]
        %v1471 = vld [vmem:[%s1441 + $0x74] sm:$0xf]
        %v1472 = vld [vmem:[%s1441 + $0x78] sm:$0xf]
        %v1473 = vld [vmem:[%s1441 + $0x7c] sm:$0xf]
        %v1506 = vunpack.c.l.b16 %v1442
        %v1507 = vunpack.c.l.b16 %v1443
        %v1508 = vunpack.c.l.b16 %v1444
        %v1509 = vunpack.c.l.b16 %v1445
        %v1510 = vunpack.c.l.b16 %v1446
        %v1511 = vunpack.c.l.b16 %v1447
        %v1512 = vunpack.c.l.b16 %v1448
        %v1513 = vunpack.c.l.b16 %v1449
        %v1514 = vunpack.c.l.b16 %v1450
        %v1515 = vunpack.c.l.b16 %v1451
        %v1516 = vunpack.c.l.b16 %v1452
        %v1517 = vunpack.c.l.b16 %v1453
        %v1518 = vunpack.c.l.b16 %v1454
        %v1519 = vunpack.c.l.b16 %v1455
        %v1520 = vunpack.c.l.b16 %v1456
        %v1521 = vunpack.c.l.b16 %v1457
        %v1522 = vunpack.c.l.b16 %v1458
        %v1523 = vunpack.c.l.b16 %v1459
        %v1524 = vunpack.c.l.b16 %v1460
        %v1525 = vunpack.c.l.b16 %v1461
        %v1526 = vunpack.c.l.b16 %v1462
        %v1527 = vunpack.c.l.b16 %v1463
        %v1528 = vunpack.c.l.b16 %v1464
        %v1529 = vunpack.c.l.b16 %v1465
        %v1530 = vunpack.c.l.b16 %v1466
        %v1531 = vunpack.c.l.b16 %v1467
        %v1532 = vunpack.c.l.b16 %v1468
        %v1533 = vunpack.c.l.b16 %v1469
        %v1534 = vunpack.c.l.b16 %v1470
        %v1535 = vunpack.c.l.b16 %v1471
        %v1536 = vunpack.c.l.b16 %v1472
        %v1537 = vunpack.c.l.b16 %v1473
        %v1538 = vpack.c.b16 %v1507, %v1506
        %v1539 = vpack.c.b16 %v1509, %v1508
        %v1540 = vpack.c.b16 %v1511, %v1510
        %v1541 = vpack.c.b16 %v1513, %v1512
        %v1542 = vpack.c.b16 %v1515, %v1514
        %v1543 = vpack.c.b16 %v1517, %v1516
        %v1544 = vpack.c.b16 %v1519, %v1518
        %v1545 = vpack.c.b16 %v1521, %v1520
        %v1546 = vpack.c.b16 %v1523, %v1522
        %v1547 = vpack.c.b16 %v1525, %v1524
        %v1548 = vpack.c.b16 %v1527, %v1526
        %v1549 = vpack.c.b16 %v1529, %v1528
        %v1550 = vpack.c.b16 %v1531, %v1530
        %v1551 = vpack.c.b16 %v1533, %v1532
        %v1552 = vpack.c.b16 %v1535, %v1534
        %v1553 = vpack.c.b16 %v1537, %v1536
        %1570 = vmatpush.bf16.msra.mxu0 %v1545
        %1571 = vmatpush.bf16.msra.mxu0 %v1544
        %1572 = vmatpush.bf16.msra.mxu0 %v1543
        %1573 = vmatpush.bf16.msra.mxu0 %v1542
        %1574 = vmatpush.bf16.msra.mxu0 %v1541
        %1575 = vmatpush.bf16.msra.mxu0 %v1540
        %1576 = vmatpush.bf16.msra.mxu0 %v1539
        %1577 = vmatpush.bf16.msra.mxu0 %v1538
        %1578 = vmatmul.bf16.gmra.mxu0 %v1439
        %v1579 = vpop.f32.mrf.mxu0
        %v1580 = vadd.f32 0.0, %v1579
        %v1581 = vpop.f32.mrf.mxu0
        %1582 = vdwg.mxu0
        %1583 = vmatpush.bf16.msra.mxu0 %v1553
        %1584 = vmatpush.bf16.msra.mxu0 %v1552
        %1585 = vmatpush.bf16.msra.mxu0 %v1551
        %1586 = vmatpush.bf16.msra.mxu0 %v1550
        %1587 = vmatpush.bf16.msra.mxu0 %v1549
        %1588 = vmatpush.bf16.msra.mxu0 %v1548
        %1589 = vmatpush.bf16.msra.mxu0 %v1547
        %1590 = vmatpush.bf16.msra.mxu0 %v1546
        %1591 = vmatmul.bf16.gmra.mxu0 %v1440
        %v1592 = vpop.f32.mrf.mxu0
        %v1593 = vadd.f32 %v1580, %v1592
        %v1594 = vpop.f32.mrf.mxu0
        %1595 = vdwg.mxu0
        %v1596 = vadd.f32 %v1405, %v1593
        %v1597 = vld [vmem:[#allocation7] sm:$0x1]
        %v1599 = vperm.slane %v1597, 0
        %v1601 = vadd.f32 %v1596, %v1599
        %v1602 = vmax.f32 %v1601, 0.0
        %v1603 = vpack.c.bf16 %v1602, %v1602
        %v1604 = vld [vmem:[%s7] sm:$0x1]
        %vm1605 = vcmask 15360
        %v1607 = vsel %vm1605, %v1604, 0
        %vm1609 = vcmask 1040384
        %v1611 = vsel %vm1609, %v1603, 0
        %1613 = vmatpush.bf16.msra.mxu0 0
        %1614 = vmatpush.bf16.msra.mxu0 0
        %1615 = vmatpush.bf16.msra.mxu0 0
        %1616 = vmatpush.bf16.msra.mxu0 0
        %1617 = vmatpush.bf16.msra.mxu0 0
        %1618 = vmatpush.bf16.msra.mxu0 0
        %1619 = vmatpush.bf16.msra.mxu0 0
        %1620 = vmatpush.bf16.msra.mxu0 %v1611
        %1621 = vmatmul.bf16.gmra.mxu0 %v1607
        %v1622 = vpop.f32.mrf.mxu0
        %v1623 = vadd.f32 0.0, %v1622
        %v1624 = vpop.f32.mrf.mxu0
        %1625 = vdwg.mxu0
        %v1626 = vpack.c.bf16 %v1623, %v1623
        %v1627 = vld [vmem:[#allocation8] sm:$0xf]
        %v1628 = vld [vmem:[#allocation8 + $0x4] sm:$0xf]
        %v1629 = vld [vmem:[#allocation8 + $0x8] sm:$0xf]
        %v1630 = vld [vmem:[#allocation8 + $0xc] sm:$0xf]
        %v1631 = vld [vmem:[#allocation8 + $0x10] sm:$0xf]
        %v1632 = vld [vmem:[#allocation8 + $0x14] sm:$0xf]
        %v1633 = vld [vmem:[#allocation8 + $0x18] sm:$0xf]
        %v1634 = vld [vmem:[#allocation8 + $0x1c] sm:$0xf]
        %v1635 = vld [vmem:[#allocation8 + $0x20] sm:$0xf]
        %v1636 = vld [vmem:[#allocation8 + $0x24] sm:$0xf]
        %v1637 = vld [vmem:[#allocation8 + $0x28] sm:$0xf]
        %v1638 = vld [vmem:[#allocation8 + $0x2c] sm:$0xf]
        %v1639 = vld [vmem:[#allocation8 + $0x30] sm:$0xf]
        %v1640 = vld [vmem:[#allocation8 + $0x34] sm:$0xf]
        %v1641 = vld [vmem:[#allocation8 + $0x38] sm:$0xf]
        %v1642 = vld [vmem:[#allocation8 + $0x3c] sm:$0xf]
        %s1643 = scalar_lea.vmem %s7, 1
        %v1644 = vld [vmem:[%s1643] sm:$0x1]
        %v1646 = vsel %vm1605, %v1644, 0
        %1648 = vmatpush.bf16.msra.mxu0 0
        %1649 = vmatpush.bf16.msra.mxu0 0
        %1650 = vmatpush.bf16.msra.mxu0 0
        %1651 = vmatpush.bf16.msra.mxu0 0
        %1652 = vmatpush.bf16.msra.mxu0 0
        %1653 = vmatpush.bf16.msra.mxu0 0
        %1654 = vmatpush.bf16.msra.mxu0 0
        %1655 = vmatpush.bf16.msra.mxu0 %v1611
        %1656 = vmatmul.bf16.gmra.mxu0 %v1646
        %v1657 = vpop.f32.mrf.mxu0
        %v1658 = vadd.f32 0.0, %v1657
        %v1659 = vpop.f32.mrf.mxu0
        %1660 = vdwg.mxu0
        %v1661 = vpack.c.bf16 %v1658, %v1658
        %s1662 = scalar_lea.vmem [#allocation8], 64
        %v1663 = vld [vmem:[%s1662] sm:$0xf]
        %v1664 = vld [vmem:[%s1662 + $0x4] sm:$0xf]
        %v1665 = vld [vmem:[%s1662 + $0x8] sm:$0xf]
        %v1666 = vld [vmem:[%s1662 + $0xc] sm:$0xf]
        %v1667 = vld [vmem:[%s1662 + $0x10] sm:$0xf]
        %v1668 = vld [vmem:[%s1662 + $0x14] sm:$0xf]
        %v1669 = vld [vmem:[%s1662 + $0x18] sm:$0xf]
        %v1670 = vld [vmem:[%s1662 + $0x1c] sm:$0xf]
        %v1671 = vld [vmem:[%s1662 + $0x20] sm:$0xf]
        %v1672 = vld [vmem:[%s1662 + $0x24] sm:$0xf]
        %v1673 = vld [vmem:[%s1662 + $0x28] sm:$0xf]
        %v1674 = vld [vmem:[%s1662 + $0x2c] sm:$0xf]
        %v1675 = vld [vmem:[%s1662 + $0x30] sm:$0xf]
        %v1676 = vld [vmem:[%s1662 + $0x34] sm:$0xf]
        %v1677 = vld [vmem:[%s1662 + $0x38] sm:$0xf]
        %v1678 = vld [vmem:[%s1662 + $0x3c] sm:$0xf]
        %v1695 = vunpack.c.l.b16 %v1663
        %v1696 = vunpack.c.l.b16 %v1664
        %v1697 = vunpack.c.l.b16 %v1665
        %v1698 = vunpack.c.l.b16 %v1666
        %v1699 = vunpack.c.l.b16 %v1667
        %v1700 = vunpack.c.l.b16 %v1668
        %v1701 = vunpack.c.l.b16 %v1669
        %v1702 = vunpack.c.l.b16 %v1670
        %v1703 = vunpack.c.l.b16 %v1671
        %v1704 = vunpack.c.l.b16 %v1672
        %v1705 = vunpack.c.l.b16 %v1673
        %v1706 = vunpack.c.l.b16 %v1674
        %v1707 = vunpack.c.l.b16 %v1675
        %v1708 = vunpack.c.l.b16 %v1676
        %v1709 = vunpack.c.l.b16 %v1677
        %v1710 = vunpack.c.l.b16 %v1678
        %v1711 = vpack.c.b16 %v1696, %v1695
        %v1712 = vpack.c.b16 %v1698, %v1697
        %v1713 = vpack.c.b16 %v1700, %v1699
        %v1714 = vpack.c.b16 %v1702, %v1701
        %v1715 = vpack.c.b16 %v1704, %v1703
        %v1716 = vpack.c.b16 %v1706, %v1705
        %v1717 = vpack.c.b16 %v1708, %v1707
        %v1718 = vpack.c.b16 %v1710, %v1709
        %1727 = vmatpush.bf16.msra.mxu0 %v1718
        %1728 = vmatpush.bf16.msra.mxu0 %v1717
        %1729 = vmatpush.bf16.msra.mxu0 %v1716
        %1730 = vmatpush.bf16.msra.mxu0 %v1715
        %1731 = vmatpush.bf16.msra.mxu0 %v1714
        %1732 = vmatpush.bf16.msra.mxu0 %v1713
        %1733 = vmatpush.bf16.msra.mxu0 %v1712
        %1734 = vmatpush.bf16.msra.mxu0 %v1711
        %1735 = vmatmul.bf16.gmra.mxu0 %v1661
        %v1736 = vpop.f32.mrf.mxu0
        %v1737 = vadd.f32 0.0, %v1736
        %v1738 = vpop.f32.mrf.mxu0
        %1739 = vdwg.mxu0
        %v1756 = vunpack.c.l.b16 %v1627
        %v1757 = vunpack.c.l.b16 %v1628
        %v1758 = vunpack.c.l.b16 %v1629
        %v1759 = vunpack.c.l.b16 %v1630
        %v1760 = vunpack.c.l.b16 %v1631
        %v1761 = vunpack.c.l.b16 %v1632
        %v1762 = vunpack.c.l.b16 %v1633
        %v1763 = vunpack.c.l.b16 %v1634
        %v1764 = vunpack.c.l.b16 %v1635
        %v1765 = vunpack.c.l.b16 %v1636
        %v1766 = vunpack.c.l.b16 %v1637
        %v1767 = vunpack.c.l.b16 %v1638
        %v1768 = vunpack.c.l.b16 %v1639
        %v1769 = vunpack.c.l.b16 %v1640
        %v1770 = vunpack.c.l.b16 %v1641
        %v1771 = vunpack.c.l.b16 %v1642
        %v1772 = vpack.c.b16 %v1757, %v1756
        %v1773 = vpack.c.b16 %v1759, %v1758
        %v1774 = vpack.c.b16 %v1761, %v1760
        %v1775 = vpack.c.b16 %v1763, %v1762
        %v1776 = vpack.c.b16 %v1765, %v1764
        %v1777 = vpack.c.b16 %v1767, %v1766
        %v1778 = vpack.c.b16 %v1769, %v1768
        %v1779 = vpack.c.b16 %v1771, %v1770
        %1788 = vmatpush.bf16.msra.mxu0 %v1779
        %1789 = vmatpush.bf16.msra.mxu0 %v1778
        %1790 = vmatpush.bf16.msra.mxu0 %v1777
        %1791 = vmatpush.bf16.msra.mxu0 %v1776
        %1792 = vmatpush.bf16.msra.mxu0 %v1775
        %1793 = vmatpush.bf16.msra.mxu0 %v1774
        %1794 = vmatpush.bf16.msra.mxu0 %v1773
        %1795 = vmatpush.bf16.msra.mxu0 %v1772
        %1796 = vmatmul.bf16.gmra.mxu0 %v1626
        %v1797 = vpop.f32.mrf.mxu0
        %v1798 = vadd.f32 %v1737, %v1797
        %v1799 = vpop.f32.mrf.mxu0
        %1800 = vdwg.mxu0
        %s1801 = scalar_lea.vmem %s7, 2
        %v1802 = vld [vmem:[%s1801] sm:$0x1]
        %v1804 = vsel %vm1605, %v1802, 0
        %1806 = vmatpush.bf16.msra.mxu0 0
        %1807 = vmatpush.bf16.msra.mxu0 0
        %1808 = vmatpush.bf16.msra.mxu0 0
        %1809 = vmatpush.bf16.msra.mxu0 0
        %1810 = vmatpush.bf16.msra.mxu0 0
        %1811 = vmatpush.bf16.msra.mxu0 0
        %1812 = vmatpush.bf16.msra.mxu0 0
        %1813 = vmatpush.bf16.msra.mxu0 %v1611
        %1814 = vmatmul.bf16.gmra.mxu0 %v1804
        %v1815 = vpop.f32.mrf.mxu0
        %v1816 = vadd.f32 0.0, %v1815
        %v1817 = vpop.f32.mrf.mxu0
        %1818 = vdwg.mxu0
        %v1819 = vpack.c.bf16 %v1816, %v1816
        %s1820 = scalar_lea.vmem [#allocation8], 128
        %v1821 = vld [vmem:[%s1820] sm:$0xf]
        %v1822 = vld [vmem:[%s1820 + $0x4] sm:$0xf]
        %v1823 = vld [vmem:[%s1820 + $0x8] sm:$0xf]
        %v1824 = vld [vmem:[%s1820 + $0xc] sm:$0xf]
        %v1825 = vld [vmem:[%s1820 + $0x10] sm:$0xf]
        %v1826 = vld [vmem:[%s1820 + $0x14] sm:$0xf]
        %v1827 = vld [vmem:[%s1820 + $0x18] sm:$0xf]
        %v1828 = vld [vmem:[%s1820 + $0x1c] sm:$0xf]
        %v1829 = vld [vmem:[%s1820 + $0x20] sm:$0xf]
        %v1830 = vld [vmem:[%s1820 + $0x24] sm:$0xf]
        %v1831 = vld [vmem:[%s1820 + $0x28] sm:$0xf]
        %v1832 = vld [vmem:[%s1820 + $0x2c] sm:$0xf]
        %v1833 = vld [vmem:[%s1820 + $0x30] sm:$0xf]
        %v1834 = vld [vmem:[%s1820 + $0x34] sm:$0xf]
        %v1835 = vld [vmem:[%s1820 + $0x38] sm:$0xf]
        %v1836 = vld [vmem:[%s1820 + $0x3c] sm:$0xf]
        %v1853 = vunpack.c.l.b16 %v1821
        %v1854 = vunpack.c.l.b16 %v1822
        %v1855 = vunpack.c.l.b16 %v1823
        %v1856 = vunpack.c.l.b16 %v1824
        %v1857 = vunpack.c.l.b16 %v1825
        %v1858 = vunpack.c.l.b16 %v1826
        %v1859 = vunpack.c.l.b16 %v1827
        %v1860 = vunpack.c.l.b16 %v1828
        %v1861 = vunpack.c.l.b16 %v1829
        %v1862 = vunpack.c.l.b16 %v1830
        %v1863 = vunpack.c.l.b16 %v1831
        %v1864 = vunpack.c.l.b16 %v1832
        %v1865 = vunpack.c.l.b16 %v1833
        %v1866 = vunpack.c.l.b16 %v1834
        %v1867 = vunpack.c.l.b16 %v1835
        %v1868 = vunpack.c.l.b16 %v1836
        %v1869 = vpack.c.b16 %v1854, %v1853
        %v1870 = vpack.c.b16 %v1856, %v1855
        %v1871 = vpack.c.b16 %v1858, %v1857
        %v1872 = vpack.c.b16 %v1860, %v1859
        %v1873 = vpack.c.b16 %v1862, %v1861
        %v1874 = vpack.c.b16 %v1864, %v1863
        %v1875 = vpack.c.b16 %v1866, %v1865
        %v1876 = vpack.c.b16 %v1868, %v1867
        %1885 = vmatpush.bf16.msra.mxu0 %v1876
        %1886 = vmatpush.bf16.msra.mxu0 %v1875
        %1887 = vmatpush.bf16.msra.mxu0 %v1874
        %1888 = vmatpush.bf16.msra.mxu0 %v1873
        %1889 = vmatpush.bf16.msra.mxu0 %v1872
        %1890 = vmatpush.bf16.msra.mxu0 %v1871
        %1891 = vmatpush.bf16.msra.mxu0 %v1870
        %1892 = vmatpush.bf16.msra.mxu0 %v1869
        %1893 = vmatmul.bf16.gmra.mxu0 %v1819
        %v1894 = vpop.f32.mrf.mxu0
        %v1895 = vadd.f32 0.0, %v1894
        %v1896 = vpop.f32.mrf.mxu0
        %1897 = vdwg.mxu0
        %v1898 = vadd.f32 %v1798, %v1895
        %v1899 = vld [vmem:[#allocation10] sm:$0x1]
        %v1900 = vadd.f32 %v1898, %v1899
        %v1901 = vmax.f32 %v1900, 0.0
        %v1902 = vpack.c.bf16 %v1901, %v1901
        %v1903 = vld [vmem:[#allocation11] sm:$0x1]
        %v1904 = vld [vmem:[%s10] sm:$0xf]
        %v1905 = vld [vmem:[%s10 + $0x4] sm:$0xf]
        %v1906 = vld [vmem:[%s10 + $0x8] sm:$0xf]
        %v1907 = vld [vmem:[%s10 + $0xc] sm:$0xf]
        %v1908 = vld [vmem:[%s10 + $0x10] sm:$0xf]
        %v1909 = vld [vmem:[%s10 + $0x14] sm:$0xf]
        %v1910 = vld [vmem:[%s10 + $0x18] sm:$0xf]
        %v1911 = vld [vmem:[%s10 + $0x1c] sm:$0xf]
        %v1912 = vld [vmem:[%s10 + $0x20] sm:$0xf]
        %v1913 = vld [vmem:[%s10 + $0x24] sm:$0xf]
        %v1914 = vld [vmem:[%s10 + $0x28] sm:$0xf]
        %v1915 = vld [vmem:[%s10 + $0x2c] sm:$0xf]
        %v1916 = vld [vmem:[%s10 + $0x30] sm:$0xf]
        %v1917 = vld [vmem:[%s10 + $0x34] sm:$0xf]
        %v1918 = vld [vmem:[%s10 + $0x38] sm:$0xf]
        %v1919 = vld [vmem:[%s10 + $0x3c] sm:$0xf]
        %v1936 = vunpack.c.l.b16 %v1904
        %v1937 = vunpack.c.l.b16 %v1905
        %v1938 = vunpack.c.l.b16 %v1906
        %v1939 = vunpack.c.l.b16 %v1907
        %v1940 = vunpack.c.l.b16 %v1908
        %v1941 = vunpack.c.l.b16 %v1909
        %v1942 = vunpack.c.l.b16 %v1910
        %v1943 = vunpack.c.l.b16 %v1911
        %v1944 = vunpack.c.l.b16 %v1912
        %v1945 = vunpack.c.l.b16 %v1913
        %v1946 = vunpack.c.l.b16 %v1914
        %v1947 = vunpack.c.l.b16 %v1915
        %v1948 = vunpack.c.l.b16 %v1916
        %v1949 = vunpack.c.l.b16 %v1917
        %v1950 = vunpack.c.l.b16 %v1918
        %v1951 = vunpack.c.l.b16 %v1919
        %v1952 = vpack.c.b16 %v1937, %v1936
        %v1953 = vpack.c.b16 %v1939, %v1938
        %v1954 = vpack.c.b16 %v1941, %v1940
        %v1955 = vpack.c.b16 %v1943, %v1942
        %v1956 = vpack.c.b16 %v1945, %v1944
        %v1957 = vpack.c.b16 %v1947, %v1946
        %v1958 = vpack.c.b16 %v1949, %v1948
        %v1959 = vpack.c.b16 %v1951, %v1950
        %1968 = vmatpush.bf16.msra.mxu0 %v1959
        %1969 = vmatpush.bf16.msra.mxu0 %v1958
        %1970 = vmatpush.bf16.msra.mxu0 %v1957
        %1971 = vmatpush.bf16.msra.mxu0 %v1956
        %1972 = vmatpush.bf16.msra.mxu0 %v1955
        %1973 = vmatpush.bf16.msra.mxu0 %v1954
        %1974 = vmatpush.bf16.msra.mxu0 %v1953
        %1975 = vmatpush.bf16.msra.mxu0 %v1952
        %1976 = vmatmul.bf16.gmra.mxu0 %v1902
        %v1977 = vpop.f32.mrf.mxu0
        %v1978 = vadd.f32 0.0, %v1977
        %v1979 = vpop.f32.mrf.mxu0
        %1980 = vdwg.mxu0
        %v1981 = vadd.f32 %v1903, %v1978
        %vm1982 = vcmask 122880
        %1983 = vst.msk [vmem:[%s614] sm:$0x1] %vm1982, %v1981
        %v1985 = vperm.slane %v1981, 0
        %1986 = vrot.lane.b32.xlu0 %v1985, 112
        %v1987 = vpop.permute.xlu0 %1986
        %1989 = vst.msk [vmem:[%s620] sm:$0x1] %vm1982, %v1987
        %v1990 = vmul.f32 %v1981, 0.5
        %v1991 = vmul.f32 %v1990, 1.442695
        %v1992 = vpow.pop %v1991
        %v1993 = vld [vmem:[%s568] sm:$0x1]
        %1995 = vrot.lane.b32.xlu0 %v1993, 16
        %v1996 = vpop.permute.xlu0 %1995
        %v1998 = vmul.f32 %v1992, %v1996
        %2000 = vrot.lane.b32.xlu0 %v1998, 112
        %v2001 = vpop.permute.xlu0 %2000
        %v2003 = vadd.f32 %v1981, %v2001
        %2004 = vst.msk [vmem:[%s626] sm:$0x1] %vm1982, %v2003
        %s2005 = sand.u32 %s328, 1
        %s2006 = scalar_lea.sflag [#allocation4], %s2005
        %s2007 = sand.u32 %s328, 1
        %s2008 = scalar_lea.vmem [#allocation14], %s2007
        %s2009 = sand.u32 %s37, 1
        %s2010 = scalar_lea.sflag [#allocation16], %s2009
        %s2011 = sand.u32 %s354, 1
        %s2012 = scalar_lea.vmem [#allocation15], %s2011
        %s2013 = sand.u32 %s37, 1
        %s2014 = scalar_lea.sflag [#allocation16], %s2013
        %s2015 = sand.u32 %s380, 1
        %s2016 = scalar_lea.vmem [#allocation17], %s2015
        // Predicated region
        $region101: #{encoder_forward.1} parent=71 // pred_check
          %p2017 = pneg %p338
        $region102: #{encoder_forward.1} parent=71 // pred_check_branch
          %2019 = sbr.rel (%p2017) target = $region104
        $region103: #{encoder_forward.1} parent=71 // pred_region
          %2021 = vsyncadd %s2006, 0
          %s2022 = scalar_lea.hbm %s13, %s37
          %s2024 = sshll.u32 %s2008, 4
          %s2025 = int_to_ptr.vmem [resolvable:$true] %s2024
          %s2026 = sshll.u32 %s2022, 4
          %s2027 = int_to_ptr.hbm [resolvable:$true] %s2026
          %2029 = dma.vmem_to_hbm [thread:$0]  %s2025, 16, %s2027, %s2006
        $region104: #{encoder_forward.1} parent=71 // pred_fallthru
          _
        // Predicated region
        $region105: #{encoder_forward.1} parent=71 // pred_check
          %p2030 = pneg %p364
        $region106: #{encoder_forward.1} parent=71 // pred_check_branch
          %2032 = sbr.rel (%p2030) target = $region108
        $region107: #{encoder_forward.1} parent=71 // pred_region
          %2034 = vsyncadd %s2010, 0
          %s2035 = scalar_lea.hbm %s14, %s37
          %s2037 = sshll.u32 %s2012, 4
          %s2038 = int_to_ptr.vmem [resolvable:$true] %s2037
          %s2039 = sshll.u32 %s2035, 4
          %s2040 = int_to_ptr.hbm [resolvable:$true] %s2039
          %2042 = dma.vmem_to_hbm [thread:$0]  %s2038, 16, %s2040, %s2010
        $region108: #{encoder_forward.1} parent=71 // pred_fallthru
          _
        // Predicated region
        $region109: #{encoder_forward.1} parent=71 // pred_check
          %p2043 = pneg %p390
        $region110: #{encoder_forward.1} parent=71 // pred_check_branch
          %2045 = sbr.rel (%p2043) target = $region112
        $region111: #{encoder_forward.1} parent=71 // pred_region
          %2047 = vsyncadd %s2014, 0
          %s2048 = scalar_lea.hbm %s15, %s37
          %s2050 = sshll.u32 %s2016, 4
          %s2051 = int_to_ptr.vmem [resolvable:$true] %s2050
          %s2052 = sshll.u32 %s2048, 4
          %s2053 = int_to_ptr.hbm [resolvable:$true] %s2052
          %2055 = dma.vmem_to_hbm [thread:$0]  %s2051, 16, %s2053, %s2014
        $region112: #{encoder_forward.1} parent=71 // pred_fallthru
          _
      $region72: #{encoder_forward.1} parent=5 // pred_fallthru
        _
      %p2056 = scmp.le.s32.totalorder 2, %s32
      // Predicated region
      $region113: #{encoder_forward.1} parent=5 // pred_check
        %p2057 = pneg %p2056
      $region114: #{encoder_forward.1} parent=5 // pred_check_branch
        %2059 = sbr.rel (%p2057) target = $region116
      $region115: #{encoder_forward.1} parent=5 // pred_region
        %s2060 = ssub.s32 %s32, 2
        // Predicated region
        $region117: #{encoder_forward.1} parent=115 // pred_check
          %p2061 = pneg %p344
        $region118: #{encoder_forward.1} parent=115 // pred_check_branch
          %2063 = sbr.rel (%p2061) target = $region120
        $region119: #{encoder_forward.1} parent=115 // pred_region
          %s2064 = sand.u32 %s329, 1
          %s2065 = scalar_lea.sflag [#allocation4], %s2064
          %s2066 = sand.u32 %s329, 1
          %s2067 = scalar_lea.vmem [#allocation14], %s2066
          %2069 = dma.done %s2065, 16
        $region120: #{encoder_forward.1} parent=115 // pred_fallthru
          _
        // Predicated region
        $region121: #{encoder_forward.1} parent=115 // pred_check
          %p2070 = pneg %p370
        $region122: #{encoder_forward.1} parent=115 // pred_check_branch
          %2072 = sbr.rel (%p2070) target = $region124
        $region123: #{encoder_forward.1} parent=115 // pred_region
          %s2073 = sand.u32 %s38, 1
          %s2074 = scalar_lea.sflag [#allocation16], %s2073
          %s2075 = sand.u32 %s355, 1
          %s2076 = scalar_lea.vmem [#allocation15], %s2075
          %2078 = dma.done %s2074, 16
        $region124: #{encoder_forward.1} parent=115 // pred_fallthru
          _
        // Predicated region
        $region125: #{encoder_forward.1} parent=115 // pred_check
          %p2079 = pneg %p396
        $region126: #{encoder_forward.1} parent=115 // pred_check_branch
          %2081 = sbr.rel (%p2079) target = $region128
        $region127: #{encoder_forward.1} parent=115 // pred_region
          %s2082 = sand.u32 %s38, 1
          %s2083 = scalar_lea.sflag [#allocation16], %s2082
          %s2084 = sand.u32 %s381, 1
          %s2085 = scalar_lea.vmem [#allocation17], %s2084
          %2087 = dma.done %s2083, 16
        $region128: #{encoder_forward.1} parent=115 // pred_fallthru
          _
      $region116: #{encoder_forward.1} parent=5 // pred_fallthru
        _
    $region6: #{encoder_forward.1} parent=1 // loop_footer
      %s36 = sadd.s32 1, %s32
    $region7: #{encoder_forward.1} parent=1 // loop_footer_branch
      %31 = sbr.rel target = $region3
    $region8: #{encoder_forward.1} parent=1 // loop_exit
      _
    %2088 = vsyncpa [#allocation3], 1
    %s2089 = scalar_lea.sflag [#allocation3], 1
    %2090 = vsyncpa %s2089, 1
    %2091 = vsyncpa [#allocation6], 1
    %2092 = vsyncpa [#allocation9], 1
    %2093 = vsyncpa [#allocation12], 1
    %2094 = vsyncpa [#allocation4], 1
    %s2095 = scalar_lea.sflag [#allocation4], 1
    %2096 = vsyncpa %s2095, 1
    %2097 = vsyncpa [#allocation16], 1
    %s2098 = scalar_lea.sflag [#allocation16], 1
    %2099 = vsyncpa %s2098, 1

</llo_original>
